<compile_context>
chip_gen: v5e
topology: v5e:2x2
jax: 0.10.0
libtpu: 0.0.40
codegen_flags: <defaults>
</compile_context>

<pallas_src>
import numpy as np

import jax
import jax.numpy as jnp
from jax.experimental import pallas as pl
from jax.experimental.pallas import tpu as pltpu


# ----------------------------------------------------------------------------
# Kernel: one batch image per grid step.  Every per-image tensor lives in the
# zero-padded, lane-folded frame (Hp, Wl), column = w*P + ci for w in [0, W+2),
# ci in [0, P); columns >= (W+2)*P are zero lane padding.
# ----------------------------------------------------------------------------
def ifm_kernel(xz_ref, yz_ref, s_ref, rx_ref, ry_ref, rxp_ref, ryp_ref, b_ref,
               out_x_ref, out_y_ref):
    f32 = jnp.float32
    bf16 = jnp.bfloat16
    wl = xz_ref.shape[-1]

    x = xz_ref[...]                     # (Hp, Wl) bf16, exact zero borders
    y = yz_ref[...]
    s_up = s_ref[0]                     # (Hp, Hp): selects row h-1 (row 0 -> 0)
    s_dn = s_ref[1]                     # selects row h+1 (last row -> 0)

    def kstack(a, b):
        # Build the K-stacked conv LHS [row(h-1) | row(h) | row(h+1)] for two
        # images at once, sharing the two tiny row-shift matmuls (the kh=1 tap
        # is the identity and needs no work).  The 0/1 shift matmul is exact in
        # bf16 and shifts in exactly the zero padding rows, so interior rows
        # match a zero-padded convolution.
        ab = jnp.concatenate([a, b], axis=1)                       # (Hp, 2*Wl)
        up = jnp.dot(s_up, ab, preferred_element_type=f32).astype(bf16)
        dn = jnp.dot(s_dn, ab, preferred_element_type=f32).astype(bf16)
        lhs_a = jnp.concatenate([up[:, :wl], a, dn[:, :wl]], axis=1)
        lhs_b = jnp.concatenate([up[:, wl:], b, dn[:, wl:]], axis=1)
        return lhs_a, lhs_b

    # ---- phase 1: conv0(x), conv1(y) and the x/y halves of conv2/conv3 -----
    lx, ly = kstack(x, y)
    p1x = jnp.dot(lx, rx_ref[...], preferred_element_type=f32)     # (Hp, 3*Wl)
    p1y = jnp.dot(ly, ry_ref[...], preferred_element_type=f32)

    feat_x0 = p1x[:, :wl] + b_ref[0:1, :]
    feat_y0 = p1y[:, :wl] + b_ref[1:2, :]
    gate = jax.nn.sigmoid(feat_x0 * feat_y0)

    xf = x.astype(f32)
    yf = y.astype(f32)
    xp = xf * gate     # zero borders preserved (x/y borders are exactly zero)
    yp = yf * gate

    # ---- phase 2: the x'/y' halves of conv2/conv3 ---------------------------
    lxp, lyp = kstack(xp.astype(bf16), yp.astype(bf16))
    p2x = jnp.dot(lxp, rxp_ref[...], preferred_element_type=f32)   # (Hp, 2*Wl)
    p2y = jnp.dot(lyp, ryp_ref[...], preferred_element_type=f32)

    wx1 = p1x[:, wl:2 * wl] + p2x[:, :wl] + b_ref[2:3, :]
    wx2 = p1x[:, 2 * wl:] + p2x[:, wl:] + b_ref[3:4, :]
    wy1 = p1y[:, wl:2 * wl] + p2y[:, :wl] + b_ref[4:5, :]
    wy2 = p1y[:, 2 * wl:] + p2y[:, wl:] + b_ref[5:6, :]

    out_x_ref[...] = (xf * wx1 + xp * wx2).astype(out_x_ref.dtype)
    out_y_ref[...] = (yf * wy1 + yp * wy2).astype(out_y_ref.dtype)


# ----------------------------------------------------------------------------
# One-time (non-jitted) weight repacking: all layout plumbing lives here.
# ----------------------------------------------------------------------------
def pack_ifm_params(params, H, W):
    P = int(params["b0"].shape[0])
    Hp, Wp = H + 2, W + 2
    WpP = Wp * P
    Wl = ((WpP + 127) // 128) * 128

    w0 = np.asarray(params["w0"], np.float32)     # (P, P, 3, 3)
    w1 = np.asarray(params["w1"], np.float32)
    w2 = np.asarray(params["w2"], np.float32)     # (2, 2P, 3, 3)
    w3 = np.asarray(params["w3"], np.float32)
    b0 = np.asarray(params["b0"], np.float32)
    b1 = np.asarray(params["b1"], np.float32)
    b2 = np.asarray(params["b2"], np.float32)
    b3 = np.asarray(params["b3"], np.float32)

    w2a, w2b = w2[:, :P], w2[:, P:]               # x-half / x'-half of conv2
    w3a, w3b = w3[:, :P], w3[:, P:]               # y-half / y'-half of conv3

    w_in = np.arange(Wp)[:, None]
    w_out = np.arange(Wp)[None, :]
    dw = w_in - w_out + 1
    valid = ((dw >= 0) & (dw <= 2) & (w_out >= 1) & (w_out <= W))
    valid = valid.astype(np.float32)
    dwc = np.clip(dw, 0, 2)

    def col_toeplitz(w_row):
        # w_row: (P, P, 3) = [co_frame, ci, kw] -> (Wl, Wl) column-mix matrix
        # T[w_in*P+ci, w_out*P+co] = w_row[co, ci, w_in - w_out + 1] (zero-pad
        # conv, interior output columns only); lane-pad rows/cols are zero.
        g = w_row[:, :, dwc] * valid[None, None]              # (P, P, Wp, Wp)
        t = np.transpose(g, (2, 1, 3, 0)).reshape(WpP, WpP)   # [win,ci,wout,co]
        out = np.zeros((Wl, Wl), np.float32)
        out[:WpP, :WpP] = t
        return out

    def rep(w_ci):
        # (P,3,3)=[ci,kh,kw] -> (P,P,3,3) replicated over the co-frame axis,
        # so single-channel conv2/conv3 outputs land lane-replicated per pixel.
        return np.broadcast_to(w_ci[None], (P, P, 3, 3))

    def fused_rhs(groups):
        # K-stack the 3 kh taps, N-stack the output groups sharing one LHS.
        ngroups = len(groups)
        r = np.zeros((3 * Wl, ngroups * Wl), np.float32)
        for g, wfull in enumerate(groups):
            for kh in range(3):
                r[kh * Wl:(kh + 1) * Wl, g * Wl:(g + 1) * Wl] = \
                    col_toeplitz(wfull[:, :, kh, :])
        return r

    rx = fused_rhs([w0, rep(w2a[0]), rep(w2a[1])])    # (3*Wl, 3*Wl)
    ry = fused_rhs([w1, rep(w3a[0]), rep(w3a[1])])
    rxp = fused_rhs([rep(w2b[0]), rep(w2b[1])])       # (3*Wl, 2*Wl)
    ryp = fused_rhs([rep(w3b[0]), rep(w3b[1])])

    bias = np.zeros((8, Wl), np.float32)              # six biases, one operand
    bias[0, :WpP] = np.tile(b0, Wp)
    bias[1, :WpP] = np.tile(b1, Wp)
    bias[2, :] = b2[0]
    bias[3, :] = b2[1]
    bias[4, :] = b3[0]
    bias[5, :] = b3[1]

    sshift = np.zeros((2, Hp, Hp), np.float32)        # row h-1 / row h+1
    for h in range(1, Hp):
        sshift[0, h, h - 1] = 1.0
    for h in range(Hp - 1):
        sshift[1, h, h + 1] = 1.0

    bf16 = jnp.bfloat16
    return {
        "rx": jnp.asarray(rx, bf16), "ry": jnp.asarray(ry, bf16),
        "rxp": jnp.asarray(rxp, bf16), "ryp": jnp.asarray(ryp, bf16),
        "bias": jnp.asarray(bias, jnp.float32),
        "sshift": jnp.asarray(sshift, bf16),
    }


# ----------------------------------------------------------------------------
# Jitted forward: fold -> pallas_call -> crop.  No constant building in here.
# ----------------------------------------------------------------------------
@jax.jit
def ifm_forward(x_nchw, y_nchw, packed):
    N, P, H, W = x_nchw.shape
    Hp, Wp = H + 2, W + 2
    WpP = Wp * P
    Wl = packed["bias"].shape[-1]
    bf16 = jnp.bfloat16

    def fold(a):                        # NCHW -> (N, Hp, Wl) bf16, zero-padded
        a = jnp.transpose(a, (0, 2, 3, 1))
        a = jnp.pad(a, ((0, 0), (1, 1), (1, 1), (0, 0)))
        a = a.reshape(N, Hp, WpP)
        a = jnp.pad(a, ((0, 0), (0, 0), (0, Wl - WpP)))
        return a.astype(bf16)

    xz = fold(x_nchw)
    yz = fold(y_nchw)

    img_spec = pl.BlockSpec((None, Hp, Wl), lambda n: (n, 0, 0))
    # Whole-array, single-buffered VMEM residents (no per-step DMA).
    const_spec = pl.BlockSpec(memory_space=pltpu.MemorySpace.VMEM)

    out_x, out_y = pl.pallas_call(
        ifm_kernel,
        out_shape=(jax.ShapeDtypeStruct((N, Hp, Wl), bf16),
                   jax.ShapeDtypeStruct((N, Hp, Wl), bf16)),
        grid_spec=pltpu.PrefetchScalarGridSpec(
            num_scalar_prefetch=0,
            grid=(N,),
            in_specs=[
                img_spec, img_spec,                 # xz, yz
                const_spec,                         # row-shift matrices
                const_spec, const_spec,             # rx, ry
                const_spec, const_spec,             # rxp, ryp
                const_spec,                         # packed biases
            ],
            out_specs=[img_spec, img_spec],
        ),
        compiler_params=pltpu.CompilerParams(
            dimension_semantics=("parallel",),
            vmem_limit_bytes=32 * 1024 * 1024),
    )(xz, yz, packed["sshift"], packed["rx"], packed["ry"],
      packed["rxp"], packed["ryp"], packed["bias"])

    def unfold(o):                      # drop lane pad + conv pad, back to NHWC
        o = o[:, :, :WpP].reshape(N, Hp, Wp, P)
        return o[:, 1:H + 1, 1:W + 1, :]

    out = jnp.concatenate([unfold(out_x), unfold(out_y)], axis=-1)
    return jnp.transpose(out, (0, 3, 1, 2)).astype(jnp.float32)   # (N, 2P, H, W)


# ----------------------------------------------------------------------------
# Pure-JAX reference (correctness check only).
# ----------------------------------------------------------------------------
def _conv2d_ref(x_nchw, w_oihw, b):
    out = jax.lax.conv_general_dilated(
        x_nchw, w_oihw, window_strides=(1, 1), padding=((1, 1), (1, 1)),
        dimension_numbers=("NCHW", "OIHW", "NCHW"))
    return out + b.reshape(1, -1, 1, 1)


def ifm_ref(x, y, p):
    fx = _conv2d_ref(x, p["w0"], p["b0"])
    fy = _conv2d_ref(y, p["w1"], p["b1"])
    w0 = jax.nn.sigmoid(fx * fy)
    xp = x * w0
    yp = y * w0
    cx = _conv2d_ref(jnp.concatenate([x, xp], axis=1), p["w2"], p["b2"])
    cy = _conv2d_ref(jnp.concatenate([y, yp], axis=1), p["w3"], p["b3"])
    wx1, wx2 = cx[:, 0:1], cx[:, 1:2]
    wy1, wy2 = cy[:, 0:1], cy[:, 1:2]
    out_x = x * wx1 + xp * wx2
    out_y = y * wy1 + yp * wy2
    return jnp.concatenate([out_x, out_y], axis=1)


if __name__ == "__main__":
    N, P, H, W = 2, 4, 16, 16
    key = jax.random.PRNGKey(0)
    keys = jax.random.split(key, 10)

    x = jax.random.normal(keys[0], (N, P, H, W), jnp.float32)
    y = jax.random.normal(keys[1], (N, P, H, W), jnp.float32)
    # The kernel ships x/y over HBM as bfloat16; pre-quantize so the kernel and
    # the f32 reference see identical input values.
    x = x.astype(jnp.bfloat16).astype(jnp.float32)
    y = y.astype(jnp.bfloat16).astype(jnp.float32)

    # Deterministic synthetic parameters (shapes from IFM.__init__, planes=P).
    params = {
        "w0": 0.1 * jax.random.normal(keys[2], (P, P, 3, 3), jnp.float32),
        "b0": 0.1 * jax.random.normal(keys[3], (P,), jnp.float32),
        "w1": 0.1 * jax.random.normal(keys[4], (P, P, 3, 3), jnp.float32),
        "b1": 0.1 * jax.random.normal(keys[5], (P,), jnp.float32),
        "w2": 0.1 * jax.random.normal(keys[6], (2, 2 * P, 3, 3), jnp.float32),
        "b2": 0.1 * jax.random.normal(keys[7], (2,), jnp.float32),
        "w3": 0.1 * jax.random.normal(keys[8], (2, 2 * P, 3, 3), jnp.float32),
        "b3": 0.1 * jax.random.normal(keys[9], (2,), jnp.float32),
    }

    packed = pack_ifm_params(params, H, W)          # one-time, outside jit

    out = jax.block_until_ready(ifm_forward(x, y, packed))
    ref = jax.block_until_ready(ifm_ref(x, y, params))

    assert out.shape == (N, 2 * P, H, W), out.shape
    # bf16 weights / bf16 x' / bf16 outputs vs. the f32 reference: tolerance is
    # scaled to the output magnitude (2% of max |ref|).
    err = float(jnp.max(jnp.abs(out - ref)))
    scale = float(jnp.max(jnp.abs(ref)))
    assert err <= 2e-2 * scale + 1e-3, (err, scale)
    print("KERNEL_OK")
</pallas_src>

<mosaic_0001>
module attributes {stable_mosaic.version = 11 : i64} {
  func.func @ifm_kernel(%arg0: i32, %arg1: memref<1x18x128xbf16, #tpu.memory_space<vmem>>, %arg2: memref<1x18x128xbf16, #tpu.memory_space<vmem>>, %arg3: memref<2x18x18xbf16, #tpu.memory_space<vmem>>, %arg4: memref<384x384xbf16, #tpu.memory_space<vmem>>, %arg5: memref<384x384xbf16, #tpu.memory_space<vmem>>, %arg6: memref<384x256xbf16, #tpu.memory_space<vmem>>, %arg7: memref<384x256xbf16, #tpu.memory_space<vmem>>, %arg8: memref<8x128xf32, #tpu.memory_space<vmem>>, %arg9: memref<1x18x128xbf16, #tpu.memory_space<vmem>>, %arg10: memref<1x18x128xbf16, #tpu.memory_space<vmem>>) attributes {dimension_semantics = [#tpu.dimension_semantics<parallel>], iteration_bounds = array<i64: 2>, scalar_prefetch = 0 : i64, scratch_operands = 0 : i64, tpu.core_type = #tpu.core_type<tc>, window_params = [{transform_indices = @transform_0, window_bounds = array<i64: 1, 18, 128>}, {transform_indices = @transform_1, window_bounds = array<i64: 1, 18, 128>}, {pipeline_mode = #tpu.pipeline_mode<synchronous>, transform_indices = @transform_2, window_bounds = array<i64: 2, 18, 18>}, {pipeline_mode = #tpu.pipeline_mode<synchronous>, transform_indices = @transform_3, window_bounds = array<i64: 384, 384>}, {pipeline_mode = #tpu.pipeline_mode<synchronous>, transform_indices = @transform_4, window_bounds = array<i64: 384, 384>}, {pipeline_mode = #tpu.pipeline_mode<synchronous>, transform_indices = @transform_5, window_bounds = array<i64: 384, 256>}, {pipeline_mode = #tpu.pipeline_mode<synchronous>, transform_indices = @transform_6, window_bounds = array<i64: 384, 256>}, {pipeline_mode = #tpu.pipeline_mode<synchronous>, transform_indices = @transform_7, window_bounds = array<i64: 8, 128>}, {transform_indices = @transform_8, window_bounds = array<i64: 1, 18, 128>}, {transform_indices = @transform_9, window_bounds = array<i64: 1, 18, 128>}]} {
    %c0 = arith.constant 0 : index
    %c0_0 = arith.constant 0 : index
    %c0_1 = arith.constant 0 : index
    %0 = vector.load %arg1[%c0, %c0_0, %c0_1] : memref<1x18x128xbf16, #tpu.memory_space<vmem>>, vector<1x18x128xbf16>
    %1 = vector.shape_cast %0 : vector<1x18x128xbf16> to vector<18x128xbf16>
    %c0_2 = arith.constant 0 : index
    %c0_3 = arith.constant 0 : index
    %c0_4 = arith.constant 0 : index
    %2 = vector.load %arg2[%c0_2, %c0_3, %c0_4] : memref<1x18x128xbf16, #tpu.memory_space<vmem>>, vector<1x18x128xbf16>
    %3 = vector.shape_cast %2 : vector<1x18x128xbf16> to vector<18x128xbf16>
    %c0_5 = arith.constant 0 : index
    %c0_6 = arith.constant 0 : index
    %c0_7 = arith.constant 0 : index
    %4 = vector.load %arg3[%c0_5, %c0_6, %c0_7] : memref<2x18x18xbf16, #tpu.memory_space<vmem>>, vector<1x18x18xbf16>
    %5 = vector.shape_cast %4 : vector<1x18x18xbf16> to vector<18x18xbf16>
    %c1 = arith.constant 1 : index
    %c0_8 = arith.constant 0 : index
    %c0_9 = arith.constant 0 : index
    %6 = vector.load %arg3[%c1, %c0_8, %c0_9] : memref<2x18x18xbf16, #tpu.memory_space<vmem>>, vector<1x18x18xbf16>
    %7 = vector.shape_cast %6 : vector<1x18x18xbf16> to vector<18x18xbf16>
    %8 = tpu.concatenate %1, %3 in 1 : vector<18x128xbf16>, vector<18x128xbf16> -> vector<18x256xbf16>
    %cst = arith.constant dense<0.000000e+00> : vector<18x256xf32>
    %9 = tpu.matmul %5, %8, %cst {dimension_numbers = #tpu.dot_dimension_numbers<[1], [0], [0], [1], [0, 0, 1, 1], [], []>} : vector<18x18xbf16>, vector<18x256xbf16>, vector<18x256xf32> -> vector<18x256xf32>
    %10 = arith.truncf %9 : vector<18x256xf32> to vector<18x256xbf16>
    %cst_10 = arith.constant dense<0.000000e+00> : vector<18x256xf32>
    %11 = tpu.matmul %7, %8, %cst_10 {dimension_numbers = #tpu.dot_dimension_numbers<[1], [0], [0], [1], [0, 0, 1, 1], [], []>} : vector<18x18xbf16>, vector<18x256xbf16>, vector<18x256xf32> -> vector<18x256xf32>
    %12 = arith.truncf %11 : vector<18x256xf32> to vector<18x256xbf16>
    %13 = vector.extract_strided_slice %10 {offsets = [0, 0], sizes = [18, 128], strides = [1, 1]} : vector<18x256xbf16> to vector<18x128xbf16>
    %14 = vector.extract_strided_slice %12 {offsets = [0, 0], sizes = [18, 128], strides = [1, 1]} : vector<18x256xbf16> to vector<18x128xbf16>
    %15 = tpu.concatenate %13, %1, %14 in 1 : vector<18x128xbf16>, vector<18x128xbf16>, vector<18x128xbf16> -> vector<18x384xbf16>
    %16 = vector.extract_strided_slice %10 {offsets = [0, 128], sizes = [18, 128], strides = [1, 1]} : vector<18x256xbf16> to vector<18x128xbf16>
    %17 = vector.extract_strided_slice %12 {offsets = [0, 128], sizes = [18, 128], strides = [1, 1]} : vector<18x256xbf16> to vector<18x128xbf16>
    %18 = tpu.concatenate %16, %3, %17 in 1 : vector<18x128xbf16>, vector<18x128xbf16>, vector<18x128xbf16> -> vector<18x384xbf16>
    %c0_11 = arith.constant 0 : index
    %c0_12 = arith.constant 0 : index
    %19 = vector.load %arg4[%c0_11, %c0_12] : memref<384x384xbf16, #tpu.memory_space<vmem>>, vector<384x384xbf16>
    %cst_13 = arith.constant dense<0.000000e+00> : vector<18x384xf32>
    %20 = tpu.matmul %15, %19, %cst_13 {dimension_numbers = #tpu.dot_dimension_numbers<[1], [0], [0], [1], [0, 0, 1, 1], [], []>} : vector<18x384xbf16>, vector<384x384xbf16>, vector<18x384xf32> -> vector<18x384xf32>
    %c0_14 = arith.constant 0 : index
    %c0_15 = arith.constant 0 : index
    %21 = vector.load %arg5[%c0_14, %c0_15] : memref<384x384xbf16, #tpu.memory_space<vmem>>, vector<384x384xbf16>
    %cst_16 = arith.constant dense<0.000000e+00> : vector<18x384xf32>
    %22 = tpu.matmul %18, %21, %cst_16 {dimension_numbers = #tpu.dot_dimension_numbers<[1], [0], [0], [1], [0, 0, 1, 1], [], []>} : vector<18x384xbf16>, vector<384x384xbf16>, vector<18x384xf32> -> vector<18x384xf32>
    %23 = vector.extract_strided_slice %20 {offsets = [0, 0], sizes = [18, 128], strides = [1, 1]} : vector<18x384xf32> to vector<18x128xf32>
    %c0_17 = arith.constant 0 : index
    %c0_18 = arith.constant 0 : index
    %24 = vector.load %arg8[%c0_17, %c0_18] : memref<8x128xf32, #tpu.memory_space<vmem>>, vector<1x128xf32>
    %25 = vector.broadcast %24 : vector<1x128xf32> to vector<18x128xf32>
    %26 = arith.addf %23, %25 : vector<18x128xf32>
    %27 = vector.extract_strided_slice %22 {offsets = [0, 0], sizes = [18, 128], strides = [1, 1]} : vector<18x384xf32> to vector<18x128xf32>
    %c1_19 = arith.constant 1 : index
    %c0_20 = arith.constant 0 : index
    %28 = vector.load %arg8[%c1_19, %c0_20] : memref<8x128xf32, #tpu.memory_space<vmem>>, vector<1x128xf32>
    %29 = vector.broadcast %28 : vector<1x128xf32> to vector<18x128xf32>
    %30 = arith.addf %27, %29 : vector<18x128xf32>
    %31 = arith.mulf %26, %30 : vector<18x128xf32>
    %32 = arith.negf %31 : vector<18x128xf32>
    %33 = math.exp %32 : vector<18x128xf32>
    %cst_21 = arith.constant 1.000000e+00 : f32
    %34 = vector.broadcast %cst_21 : f32 to vector<18x128xf32>
    %35 = arith.addf %34, %33 : vector<18x128xf32>
    %36 = arith.divf %34, %35 : vector<18x128xf32>
    %37 = arith.extf %1 : vector<18x128xbf16> to vector<18x128xf32>
    %38 = arith.extf %3 : vector<18x128xbf16> to vector<18x128xf32>
    %39 = arith.mulf %37, %36 : vector<18x128xf32>
    %40 = arith.mulf %38, %36 : vector<18x128xf32>
    %41 = arith.truncf %39 : vector<18x128xf32> to vector<18x128xbf16>
    %42 = arith.truncf %40 : vector<18x128xf32> to vector<18x128xbf16>
    %43 = tpu.concatenate %41, %42 in 1 : vector<18x128xbf16>, vector<18x128xbf16> -> vector<18x256xbf16>
    %cst_22 = arith.constant dense<0.000000e+00> : vector<18x256xf32>
    %44 = tpu.matmul %5, %43, %cst_22 {dimension_numbers = #tpu.dot_dimension_numbers<[1], [0], [0], [1], [0, 0, 1, 1], [], []>} : vector<18x18xbf16>, vector<18x256xbf16>, vector<18x256xf32> -> vector<18x256xf32>
    %45 = arith.truncf %44 : vector<18x256xf32> to vector<18x256xbf16>
    %cst_23 = arith.constant dense<0.000000e+00> : vector<18x256xf32>
    %46 = tpu.matmul %7, %43, %cst_23 {dimension_numbers = #tpu.dot_dimension_numbers<[1], [0], [0], [1], [0, 0, 1, 1], [], []>} : vector<18x18xbf16>, vector<18x256xbf16>, vector<18x256xf32> -> vector<18x256xf32>
    %47 = arith.truncf %46 : vector<18x256xf32> to vector<18x256xbf16>
    %48 = vector.extract_strided_slice %45 {offsets = [0, 0], sizes = [18, 128], strides = [1, 1]} : vector<18x256xbf16> to vector<18x128xbf16>
    %49 = vector.extract_strided_slice %47 {offsets = [0, 0], sizes = [18, 128], strides = [1, 1]} : vector<18x256xbf16> to vector<18x128xbf16>
    %50 = tpu.concatenate %48, %41, %49 in 1 : vector<18x128xbf16>, vector<18x128xbf16>, vector<18x128xbf16> -> vector<18x384xbf16>
    %51 = vector.extract_strided_slice %45 {offsets = [0, 128], sizes = [18, 128], strides = [1, 1]} : vector<18x256xbf16> to vector<18x128xbf16>
    %52 = vector.extract_strided_slice %47 {offsets = [0, 128], sizes = [18, 128], strides = [1, 1]} : vector<18x256xbf16> to vector<18x128xbf16>
    %53 = tpu.concatenate %51, %42, %52 in 1 : vector<18x128xbf16>, vector<18x128xbf16>, vector<18x128xbf16> -> vector<18x384xbf16>
    %c0_24 = arith.constant 0 : index
    %c0_25 = arith.constant 0 : index
    %54 = vector.load %arg6[%c0_24, %c0_25] : memref<384x256xbf16, #tpu.memory_space<vmem>>, vector<384x256xbf16>
    %cst_26 = arith.constant dense<0.000000e+00> : vector<18x256xf32>
    %55 = tpu.matmul %50, %54, %cst_26 {dimension_numbers = #tpu.dot_dimension_numbers<[1], [0], [0], [1], [0, 0, 1, 1], [], []>} : vector<18x384xbf16>, vector<384x256xbf16>, vector<18x256xf32> -> vector<18x256xf32>
    %c0_27 = arith.constant 0 : index
    %c0_28 = arith.constant 0 : index
    %56 = vector.load %arg7[%c0_27, %c0_28] : memref<384x256xbf16, #tpu.memory_space<vmem>>, vector<384x256xbf16>
    %cst_29 = arith.constant dense<0.000000e+00> : vector<18x256xf32>
    %57 = tpu.matmul %53, %56, %cst_29 {dimension_numbers = #tpu.dot_dimension_numbers<[1], [0], [0], [1], [0, 0, 1, 1], [], []>} : vector<18x384xbf16>, vector<384x256xbf16>, vector<18x256xf32> -> vector<18x256xf32>
    %58 = vector.extract_strided_slice %20 {offsets = [0, 128], sizes = [18, 128], strides = [1, 1]} : vector<18x384xf32> to vector<18x128xf32>
    %59 = vector.extract_strided_slice %55 {offsets = [0, 0], sizes = [18, 128], strides = [1, 1]} : vector<18x256xf32> to vector<18x128xf32>
    %60 = arith.addf %58, %59 : vector<18x128xf32>
    %c2 = arith.constant 2 : index
    %c0_30 = arith.constant 0 : index
    %61 = vector.load %arg8[%c2, %c0_30] : memref<8x128xf32, #tpu.memory_space<vmem>>, vector<1x128xf32>
    %62 = vector.broadcast %61 : vector<1x128xf32> to vector<18x128xf32>
    %63 = arith.addf %60, %62 : vector<18x128xf32>
    %64 = vector.extract_strided_slice %20 {offsets = [0, 256], sizes = [18, 128], strides = [1, 1]} : vector<18x384xf32> to vector<18x128xf32>
    %65 = vector.extract_strided_slice %55 {offsets = [0, 128], sizes = [18, 128], strides = [1, 1]} : vector<18x256xf32> to vector<18x128xf32>
    %66 = arith.addf %64, %65 : vector<18x128xf32>
    %c3 = arith.constant 3 : index
    %c0_31 = arith.constant 0 : index
    %67 = vector.load %arg8[%c3, %c0_31] : memref<8x128xf32, #tpu.memory_space<vmem>>, vector<1x128xf32>
    %68 = vector.broadcast %67 : vector<1x128xf32> to vector<18x128xf32>
    %69 = arith.addf %66, %68 : vector<18x128xf32>
    %70 = vector.extract_strided_slice %22 {offsets = [0, 128], sizes = [18, 128], strides = [1, 1]} : vector<18x384xf32> to vector<18x128xf32>
    %71 = vector.extract_strided_slice %57 {offsets = [0, 0], sizes = [18, 128], strides = [1, 1]} : vector<18x256xf32> to vector<18x128xf32>
    %72 = arith.addf %70, %71 : vector<18x128xf32>
    %c4 = arith.constant 4 : index
    %c0_32 = arith.constant 0 : index
    %73 = vector.load %arg8[%c4, %c0_32] : memref<8x128xf32, #tpu.memory_space<vmem>>, vector<1x128xf32>
    %74 = vector.broadcast %73 : vector<1x128xf32> to vector<18x128xf32>
    %75 = arith.addf %72, %74 : vector<18x128xf32>
    %76 = vector.extract_strided_slice %22 {offsets = [0, 256], sizes = [18, 128], strides = [1, 1]} : vector<18x384xf32> to vector<18x128xf32>
    %77 = vector.extract_strided_slice %57 {offsets = [0, 128], sizes = [18, 128], strides = [1, 1]} : vector<18x256xf32> to vector<18x128xf32>
    %78 = arith.addf %76, %77 : vector<18x128xf32>
    %c5 = arith.constant 5 : index
    %c0_33 = arith.constant 0 : index
    %79 = vector.load %arg8[%c5, %c0_33] : memref<8x128xf32, #tpu.memory_space<vmem>>, vector<1x128xf32>
    %80 = vector.broadcast %79 : vector<1x128xf32> to vector<18x128xf32>
    %81 = arith.addf %78, %80 : vector<18x128xf32>
    %82 = arith.mulf %37, %63 : vector<18x128xf32>
    %83 = arith.mulf %39, %69 : vector<18x128xf32>
    %84 = arith.addf %82, %83 : vector<18x128xf32>
    %85 = arith.truncf %84 : vector<18x128xf32> to vector<18x128xbf16>
    %c0_34 = arith.constant 0 : index
    %c0_35 = arith.constant 0 : index
    %c0_36 = arith.constant 0 : index
    %86 = vector.load %arg9[%c0_34, %c0_35, %c0_36] : memref<1x18x128xbf16, #tpu.memory_space<vmem>>, vector<1x18x128xbf16>
    %87 = vector.shape_cast %86 : vector<1x18x128xbf16> to vector<18x128xbf16>
    %88 = vector.shape_cast %85 : vector<18x128xbf16> to vector<1x18x128xbf16>
    tpu.vector_store %arg9[%c0_34, %c0_35, %c0_36], %88 {strides = array<i32>} : memref<1x18x128xbf16, #tpu.memory_space<vmem>>, vector<1x18x128xbf16>,
    %89 = arith.mulf %38, %75 : vector<18x128xf32>
    %90 = arith.mulf %40, %81 : vector<18x128xf32>
    %91 = arith.addf %89, %90 : vector<18x128xf32>
    %92 = arith.truncf %91 : vector<18x128xf32> to vector<18x128xbf16>
    %c0_37 = arith.constant 0 : index
    %c0_38 = arith.constant 0 : index
    %c0_39 = arith.constant 0 : index
    %93 = vector.load %arg10[%c0_37, %c0_38, %c0_39] : memref<1x18x128xbf16, #tpu.memory_space<vmem>>, vector<1x18x128xbf16>
    %94 = vector.shape_cast %93 : vector<1x18x128xbf16> to vector<18x128xbf16>
    %95 = vector.shape_cast %92 : vector<18x128xbf16> to vector<1x18x128xbf16>
    tpu.vector_store %arg10[%c0_37, %c0_38, %c0_39], %95 {strides = array<i32>} : memref<1x18x128xbf16, #tpu.memory_space<vmem>>, vector<1x18x128xbf16>,
    return
  }
  func.func @transform_0(%arg0: i32) -> (i32, i32, i32) {
    %c0_i32 = arith.constant 0 : i32
    %c0_i32_0 = arith.constant 0 : i32
    %c0_i32_1 = arith.constant 0 : i32
    return %arg0, %c0_i32, %c0_i32_0 : i32, i32, i32
  }
  func.func @transform_1(%arg0: i32) -> (i32, i32, i32) {
    %c0_i32 = arith.constant 0 : i32
    %c0_i32_0 = arith.constant 0 : i32
    %c0_i32_1 = arith.constant 0 : i32
    return %arg0, %c0_i32, %c0_i32_0 : i32, i32, i32
  }
  func.func @transform_2(%arg0: i32) -> (i32, i32, i32) {
    %c0_i32 = arith.constant 0 : i32
    %c0_i32_0 = arith.constant 0 : i32
    %c0_i32_1 = arith.constant 0 : i32
    %c0_i32_2 = arith.constant 0 : i32
    return %c0_i32, %c0_i32_0, %c0_i32_1 : i32, i32, i32
  }
  func.func @transform_3(%arg0: i32) -> (i32, i32) {
    %c0_i32 = arith.constant 0 : i32
    %c0_i32_0 = arith.constant 0 : i32
    %c0_i32_1 = arith.constant 0 : i32
    return %c0_i32, %c0_i32_0 : i32, i32
  }
  func.func @transform_4(%arg0: i32) -> (i32, i32) {
    %c0_i32 = arith.constant 0 : i32
    %c0_i32_0 = arith.constant 0 : i32
    %c0_i32_1 = arith.constant 0 : i32
    return %c0_i32, %c0_i32_0 : i32, i32
  }
  func.func @transform_5(%arg0: i32) -> (i32, i32) {
    %c0_i32 = arith.constant 0 : i32
    %c0_i32_0 = arith.constant 0 : i32
    %c0_i32_1 = arith.constant 0 : i32
    return %c0_i32, %c0_i32_0 : i32, i32
  }
  func.func @transform_6(%arg0: i32) -> (i32, i32) {
    %c0_i32 = arith.constant 0 : i32
    %c0_i32_0 = arith.constant 0 : i32
    %c0_i32_1 = arith.constant 0 : i32
    return %c0_i32, %c0_i32_0 : i32, i32
  }
  func.func @transform_7(%arg0: i32) -> (i32, i32) {
    %c0_i32 = arith.constant 0 : i32
    %c0_i32_0 = arith.constant 0 : i32
    %c0_i32_1 = arith.constant 0 : i32
    return %c0_i32, %c0_i32_0 : i32, i32
  }
  func.func @transform_8(%arg0: i32) -> (i32, i32, i32) {
    %c0_i32 = arith.constant 0 : i32
    %c0_i32_0 = arith.constant 0 : i32
    %c0_i32_1 = arith.constant 0 : i32
    return %arg0, %c0_i32, %c0_i32_0 : i32, i32, i32
  }
  func.func @transform_9(%arg0: i32) -> (i32, i32, i32) {
    %c0_i32 = arith.constant 0 : i32
    %c0_i32_0 = arith.constant 0 : i32
    %c0_i32_1 = arith.constant 0 : i32
    return %arg0, %c0_i32, %c0_i32_0 : i32, i32, i32
  }
}

</mosaic_0001>

<llo_original>
// kernel: ifm_forward.1
$region0: #{ifm_forward.1}
  #allocation0 [shape = 'u32[]', space=smem, size = 0x4, offset = 0x4, fixed_abs, tag = 'smem constant byte address 0x4 - core index']
  #allocation1 [shape = 'u32[72,128]{1,0:T(1,128)}', space=vmem, size = 0x9000, scoped, tag = 'internal scratch']
  %s0 = inlined_call_operand.vmem [shape: bf16[2,18,128], index: 0, kind: input, shape index: {}]
  %s1 = inlined_call_operand.vmem [shape: bf16[2,18,128], index: 1, kind: input, shape index: {}]
  %s2 = inlined_call_operand.vmem [shape: bf16[2,18,18], index: 2, kind: input, shape index: {}]
  %s3 = inlined_call_operand.vmem [shape: bf16[384,384], index: 3, kind: input, shape index: {}]
  %s4 = inlined_call_operand.hbm [shape: bf16[384,384], index: 4, kind: input, shape index: {}]
  %s5 = inlined_call_operand.vmem [shape: bf16[384,256], index: 5, kind: input, shape index: {}]
  %s6 = inlined_call_operand.hbm [shape: bf16[384,256], index: 6, kind: input, shape index: {}]
  %s7 = inlined_call_operand.vmem [shape: f32[8,128], index: 7, kind: input, shape index: {}]
  %s8 = inlined_call_operand.vmem [shape: bf16[2,18,128], index: 8, kind: output, shape index: {0}]
  %s9 = inlined_call_operand.vmem [shape: bf16[2,18,128], index: 9, kind: output, shape index: {1}]
  %10 = xla_tuple %s8, %s9
  %s11 = sld [smem:[#allocation0]]
  $region81: #{ifm_forward.1} parent=0
    _
  %s13 = ssub.s32 1, %s11
  %s14 = scalar_select 0, %s13, %s11
  $region1: #{ifm_forward.1} parent=0
    #allocation2 [shape = 'u8[294912]{0}', space=vmem, size = 0x48000, scoped, tag = 'input window, operand 4, single buffered']
    #allocation3 [shape = 's32[2]{0}', space=sflag, size = 0x8, scoped, tag = 'scoped memory for ifm_forward.1']
    #allocation4 [shape = 'u8[196608]{0}', space=vmem, size = 0x30000, scoped, tag = 'input window, operand 6, single buffered']
    #allocation5 [shape = 's32[1]{0}', space=sflag, size = 0x4, scoped, tag = 'scoped memory for ifm_forward.1']
    %15 = vsyncpa [#allocation3], 0
    %16 = vsyncpa [#allocation5], 0
    loop: start=0, step=1, limit=4
    $region2: #{ifm_forward.1} parent=1 // loop_pre_header
      _
    $region3: #{ifm_forward.1} parent=1 // loop_header
      %s18 = sphi 0, %s22
      %p19 = scmp.ge.s32.totalorder %s18, 4
      %s28 = sphi 0, %s30
      %s31 = sphi 0, %s28
      %s32 = sphi 0, %s31
      %s48 = sphi 0, %s32
      %s54 = sphi 0, %s56
      %s57 = sphi 0, %s54
      %s58 = sphi 0, %s57
      %s74 = sphi 0, %s58
      %s78 = sphi 0, %s78
      %s80 = sphi 0, %s78
      %s81 = sphi 0, %s80
      %s95 = sphi 0, %s81
      %s99 = sphi 0, %s99
      %s101 = sphi 0, %s99
      %s102 = sphi 0, %s101
      %s116 = sphi 0, %s102
      %s120 = sphi 0, %s120
      %s122 = sphi 0, %s120
      %s123 = sphi 0, %s122
      %s137 = sphi 0, %s123
      %s141 = sphi 0, %s141
      %s143 = sphi 0, %s141
      %s144 = sphi 0, %s143
      %s158 = sphi 0, %s144
      %s162 = sphi 0, %s162
      %s164 = sphi 0, %s162
      %s165 = sphi 0, %s164
      %s179 = sphi 0, %s165
      %s183 = sphi 0, %s183
      %s185 = sphi 0, %s183
      %s186 = sphi 0, %s185
      %s200 = sphi 0, %s186
      %s206 = sphi 0, %s208
      %s209 = sphi 0, %s206
      %s210 = sphi 0, %s209
      %s226 = sphi 0, %s210
      %s232 = sphi 0, %s234
      %s235 = sphi 0, %s232
      %s236 = sphi 0, %s235
      %s252 = sphi 0, %s236
    $region4: #{ifm_forward.1} parent=1 // loop_header_branch
      %21 = sbr.rel (%p19) target = $region8
    $region5: #{ifm_forward.1} parent=1 // loop_body
      %s23 = ssub.s32 %s18, 1
      %s24 = ssub.s32 %s18, 2
      %s25 = sadd.s32 %s18, 1
      %s26 = ssub.s32 %s18, %s25
      %p27 = scmp.eq.s32.totalorder %s26, 0
      %s29 = sadd.s32 %s28, 1
      %s30 = scalar_select %p27, %s28, %s29
      %p33 = pneg %p27
      %p34 = scmp.eq.s32.totalorder %s18, 1
      %p35 = por %p33, %p34
      %p36 = scmp.ne.s32.totalorder %s28, %s31
      %p37 = scmp.eq.s32.totalorder %s18, 0
      %p38 = por %p36, %p37
      %p39 = scmp.ne.s32.totalorder %s28, %s31
      %p40 = scmp.eq.s32.totalorder %s23, 1
      %p41 = por %p39, %p40
      %p42 = scmp.ne.s32.totalorder %s31, %s32
      %p43 = scmp.eq.s32.totalorder %s23, 0
      %p44 = por %p42, %p43
      %p45 = scmp.ne.s32.totalorder %s31, %s32
      %p46 = scmp.eq.s32.totalorder %s24, 1
      %p47 = por %p45, %p46
      %p49 = scmp.ne.s32.totalorder %s32, %s48
      %p50 = scmp.eq.s32.totalorder %s24, 0
      %p51 = por %p49, %p50
      %s52 = ssub.s32 %s18, %s25
      %p53 = scmp.eq.s32.totalorder %s52, 0
      %s55 = sadd.s32 %s54, 1
      %s56 = scalar_select %p53, %s54, %s55
      %p59 = pneg %p53
      %p60 = scmp.eq.s32.totalorder %s18, 1
      %p61 = por %p59, %p60
      %p62 = scmp.ne.s32.totalorder %s54, %s57
      %p63 = scmp.eq.s32.totalorder %s18, 0
      %p64 = por %p62, %p63
      %p65 = scmp.ne.s32.totalorder %s54, %s57
      %p66 = scmp.eq.s32.totalorder %s23, 1
      %p67 = por %p65, %p66
      %p68 = scmp.ne.s32.totalorder %s57, %s58
      %p69 = scmp.eq.s32.totalorder %s23, 0
      %p70 = por %p68, %p69
      %p71 = scmp.ne.s32.totalorder %s57, %s58
      %p72 = scmp.eq.s32.totalorder %s24, 1
      %p73 = por %p71, %p72
      %p75 = scmp.ne.s32.totalorder %s58, %s74
      %p76 = scmp.eq.s32.totalorder %s24, 0
      %p77 = por %p75, %p76
      %s79 = sadd.s32 %s78, 1
      %p82 = scmp.eq.s32.totalorder %s18, 1
      %p83 = scmp.ne.s32.totalorder %s78, %s80
      %p84 = scmp.eq.s32.totalorder %s18, 0
      %p85 = por %p83, %p84
      %p86 = scmp.ne.s32.totalorder %s78, %s80
      %p87 = scmp.eq.s32.totalorder %s23, 1
      %p88 = por %p86, %p87
      %p89 = scmp.ne.s32.totalorder %s80, %s81
      %p90 = scmp.eq.s32.totalorder %s23, 0
      %p91 = por %p89, %p90
      %p92 = scmp.ne.s32.totalorder %s80, %s81
      %p93 = scmp.eq.s32.totalorder %s24, 1
      %p94 = por %p92, %p93
      %p96 = scmp.ne.s32.totalorder %s81, %s95
      %p97 = scmp.eq.s32.totalorder %s24, 0
      %p98 = por %p96, %p97
      %s100 = sadd.s32 %s99, 1
      %p103 = scmp.eq.s32.totalorder %s18, 1
      %p104 = scmp.ne.s32.totalorder %s99, %s101
      %p105 = scmp.eq.s32.totalorder %s18, 0
      %p106 = por %p104, %p105
      %p107 = scmp.ne.s32.totalorder %s99, %s101
      %p108 = scmp.eq.s32.totalorder %s23, 1
      %p109 = por %p107, %p108
      %p110 = scmp.ne.s32.totalorder %s101, %s102
      %p111 = scmp.eq.s32.totalorder %s23, 0
      %p112 = por %p110, %p111
      %p113 = scmp.ne.s32.totalorder %s101, %s102
      %p114 = scmp.eq.s32.totalorder %s24, 1
      %p115 = por %p113, %p114
      %p117 = scmp.ne.s32.totalorder %s102, %s116
      %p118 = scmp.eq.s32.totalorder %s24, 0
      %p119 = por %p117, %p118
      %s121 = sadd.s32 %s120, 1
      %p124 = scmp.eq.s32.totalorder %s18, 1
      %p125 = scmp.ne.s32.totalorder %s120, %s122
      %p126 = scmp.eq.s32.totalorder %s18, 0
      %p127 = por %p125, %p126
      %p128 = scmp.ne.s32.totalorder %s120, %s122
      %p129 = scmp.eq.s32.totalorder %s23, 1
      %p130 = por %p128, %p129
      %p131 = scmp.ne.s32.totalorder %s122, %s123
      %p132 = scmp.eq.s32.totalorder %s23, 0
      %p133 = por %p131, %p132
      %p134 = scmp.ne.s32.totalorder %s122, %s123
      %p135 = scmp.eq.s32.totalorder %s24, 1
      %p136 = por %p134, %p135
      %p138 = scmp.ne.s32.totalorder %s123, %s137
      %p139 = scmp.eq.s32.totalorder %s24, 0
      %p140 = por %p138, %p139
      %s142 = sadd.s32 %s141, 1
      %p145 = scmp.eq.s32.totalorder %s18, 1
      %p146 = scmp.ne.s32.totalorder %s141, %s143
      %p147 = scmp.eq.s32.totalorder %s18, 0
      %p148 = por %p146, %p147
      %p149 = scmp.ne.s32.totalorder %s141, %s143
      %p150 = scmp.eq.s32.totalorder %s23, 1
      %p151 = por %p149, %p150
      %p152 = scmp.ne.s32.totalorder %s143, %s144
      %p153 = scmp.eq.s32.totalorder %s23, 0
      %p154 = por %p152, %p153
      %p155 = scmp.ne.s32.totalorder %s143, %s144
      %p156 = scmp.eq.s32.totalorder %s24, 1
      %p157 = por %p155, %p156
      %p159 = scmp.ne.s32.totalorder %s144, %s158
      %p160 = scmp.eq.s32.totalorder %s24, 0
      %p161 = por %p159, %p160
      %s163 = sadd.s32 %s162, 1
      %p166 = scmp.eq.s32.totalorder %s18, 1
      %p167 = scmp.ne.s32.totalorder %s162, %s164
      %p168 = scmp.eq.s32.totalorder %s18, 0
      %p169 = por %p167, %p168
      %p170 = scmp.ne.s32.totalorder %s162, %s164
      %p171 = scmp.eq.s32.totalorder %s23, 1
      %p172 = por %p170, %p171
      %p173 = scmp.ne.s32.totalorder %s164, %s165
      %p174 = scmp.eq.s32.totalorder %s23, 0
      %p175 = por %p173, %p174
      %p176 = scmp.ne.s32.totalorder %s164, %s165
      %p177 = scmp.eq.s32.totalorder %s24, 1
      %p178 = por %p176, %p177
      %p180 = scmp.ne.s32.totalorder %s165, %s179
      %p181 = scmp.eq.s32.totalorder %s24, 0
      %p182 = por %p180, %p181
      %s184 = sadd.s32 %s183, 1
      %p187 = scmp.eq.s32.totalorder %s18, 1
      %p188 = scmp.ne.s32.totalorder %s183, %s185
      %p189 = scmp.eq.s32.totalorder %s18, 0
      %p190 = por %p188, %p189
      %p191 = scmp.ne.s32.totalorder %s183, %s185
      %p192 = scmp.eq.s32.totalorder %s23, 1
      %p193 = por %p191, %p192
      %p194 = scmp.ne.s32.totalorder %s185, %s186
      %p195 = scmp.eq.s32.totalorder %s23, 0
      %p196 = por %p194, %p195
      %p197 = scmp.ne.s32.totalorder %s185, %s186
      %p198 = scmp.eq.s32.totalorder %s24, 1
      %p199 = por %p197, %p198
      %p201 = scmp.ne.s32.totalorder %s186, %s200
      %p202 = scmp.eq.s32.totalorder %s24, 0
      %p203 = por %p201, %p202
      %s204 = ssub.s32 %s18, %s25
      %p205 = scmp.eq.s32.totalorder %s204, 0
      %s207 = sadd.s32 %s206, 1
      %s208 = scalar_select %p205, %s206, %s207
      %p211 = pneg %p205
      %p212 = scmp.eq.s32.totalorder %s18, 1
      %p213 = por %p211, %p212
      %p214 = scmp.ne.s32.totalorder %s206, %s209
      %p215 = scmp.eq.s32.totalorder %s18, 0
      %p216 = por %p214, %p215
      %p217 = scmp.ne.s32.totalorder %s206, %s209
      %p218 = scmp.eq.s32.totalorder %s23, 1
      %p219 = por %p217, %p218
      %p220 = scmp.ne.s32.totalorder %s209, %s210
      %p221 = scmp.eq.s32.totalorder %s23, 0
      %p222 = por %p220, %p221
      %p223 = scmp.ne.s32.totalorder %s209, %s210
      %p224 = scmp.eq.s32.totalorder %s24, 1
      %p225 = por %p223, %p224
      %p227 = scmp.ne.s32.totalorder %s210, %s226
      %p228 = scmp.eq.s32.totalorder %s24, 0
      %p229 = por %p227, %p228
      %s230 = ssub.s32 %s18, %s25
      %p231 = scmp.eq.s32.totalorder %s230, 0
      %s233 = sadd.s32 %s232, 1
      %s234 = scalar_select %p231, %s232, %s233
      %p237 = pneg %p231
      %p238 = scmp.eq.s32.totalorder %s18, 1
      %p239 = por %p237, %p238
      %p240 = scmp.ne.s32.totalorder %s232, %s235
      %p241 = scmp.eq.s32.totalorder %s18, 0
      %p242 = por %p240, %p241
      %p243 = scmp.ne.s32.totalorder %s232, %s235
      %p244 = scmp.eq.s32.totalorder %s23, 1
      %p245 = por %p243, %p244
      %p246 = scmp.ne.s32.totalorder %s235, %s236
      %p247 = scmp.eq.s32.totalorder %s23, 0
      %p248 = por %p246, %p247
      %p249 = scmp.ne.s32.totalorder %s235, %s236
      %p250 = scmp.eq.s32.totalorder %s24, 1
      %p251 = por %p249, %p250
      %p253 = scmp.ne.s32.totalorder %s236, %s252
      %p254 = scmp.eq.s32.totalorder %s24, 0
      %p255 = por %p253, %p254
      %p256 = scmp.le.s32.totalorder 1, %s18
      %p257 = scmp.lt.s32.totalorder %s18, 3
      %p258 = pnand %p256, %p257
      %p259 = pneg %p258
      // Predicated region
      $region9: #{ifm_forward.1} parent=5 // pred_check
        _
      $region10: #{ifm_forward.1} parent=5 // pred_check_branch
        %261 = sbr.rel (%p258) target = $region12
      $region11: #{ifm_forward.1} parent=5 // pred_region
        %s262 = ssub.s32 %s18, 1
        // Predicated region
        $region13: #{ifm_forward.1} parent=11 // pred_check
          %p263 = pneg %p91
        $region14: #{ifm_forward.1} parent=11 // pred_check_branch
          %265 = sbr.rel (%p263) target = $region16
        $region15: #{ifm_forward.1} parent=11 // pred_region
          _
        $region16: #{ifm_forward.1} parent=11 // pred_fallthru
          _
        // Predicated region
        $region17: #{ifm_forward.1} parent=11 // pred_check
          %p266 = pneg %p112
        $region18: #{ifm_forward.1} parent=11 // pred_check_branch
          %268 = sbr.rel (%p266) target = $region20
        $region19: #{ifm_forward.1} parent=11 // pred_region
          _
        $region20: #{ifm_forward.1} parent=11 // pred_fallthru
          _
        // Predicated region
        $region21: #{ifm_forward.1} parent=11 // pred_check
          %p269 = pneg %p133
        $region22: #{ifm_forward.1} parent=11 // pred_check_branch
          %271 = sbr.rel (%p269) target = $region24
        $region23: #{ifm_forward.1} parent=11 // pred_region
          %273 = vsyncadd [#allocation3], 0
          %s274 = sshll.u32 %s4, 4
          %s275 = int_to_ptr.hbm [resolvable:$true] %s274
          %s276 = sshll.u32 [#allocation2], 4
          %s277 = int_to_ptr.vmem [resolvable:$true] %s276
          %282 = dma.hbm_to_vmem [thread:$0]  %s275, 9216, %s277, [#allocation3], 192, 192, 12
        $region24: #{ifm_forward.1} parent=11 // pred_fallthru
          _
        // Predicated region
        $region25: #{ifm_forward.1} parent=11 // pred_check
          %p283 = pneg %p154
        $region26: #{ifm_forward.1} parent=11 // pred_check_branch
          %285 = sbr.rel (%p283) target = $region28
        $region27: #{ifm_forward.1} parent=11 // pred_region
          _
        $region28: #{ifm_forward.1} parent=11 // pred_fallthru
          _
        // Predicated region
        $region29: #{ifm_forward.1} parent=11 // pred_check
          %p286 = pneg %p175
        $region30: #{ifm_forward.1} parent=11 // pred_check_branch
          %288 = sbr.rel (%p286) target = $region32
        $region31: #{ifm_forward.1} parent=11 // pred_region
          %290 = vsyncadd [#allocation5], 0
          %s291 = sshll.u32 %s6, 4
          %s292 = int_to_ptr.hbm [resolvable:$true] %s291
          %s293 = sshll.u32 [#allocation4], 4
          %s294 = int_to_ptr.vmem [resolvable:$true] %s293
          %299 = dma.hbm_to_vmem [thread:$0]  %s292, 6144, %s294, [#allocation5], 128, 128, 8
        $region32: #{ifm_forward.1} parent=11 // pred_fallthru
          _
        // Predicated region
        $region33: #{ifm_forward.1} parent=11 // pred_check
          %p300 = pneg %p196
        $region34: #{ifm_forward.1} parent=11 // pred_check_branch
          %302 = sbr.rel (%p300) target = $region36
        $region35: #{ifm_forward.1} parent=11 // pred_region
          _
        $region36: #{ifm_forward.1} parent=11 // pred_fallthru
          _
      $region12: #{ifm_forward.1} parent=5 // pred_fallthru
        _
      %p303 = scmp.lt.s32.totalorder %s18, 2
      // Predicated region
      $region37: #{ifm_forward.1} parent=5 // pred_check
        %p304 = pneg %p303
      $region38: #{ifm_forward.1} parent=5 // pred_check_branch
        %306 = sbr.rel (%p304) target = $region40
      $region39: #{ifm_forward.1} parent=5 // pred_region
        // Predicated region
        $region41: #{ifm_forward.1} parent=39 // pred_check
          %p307 = pneg %p38
        $region42: #{ifm_forward.1} parent=39 // pred_check_branch
          %309 = sbr.rel (%p307) target = $region44
        $region43: #{ifm_forward.1} parent=39 // pred_region
          %p310 = scmp.lt.s32.totalorder %s18, 1
          %s311 = scalar_select %p310, %s18, 1
          %s312 = smul.addr %s311, 3
          %s313 = smul.addr %s312, 4
          %s314 = scalar_lea.vmem %s0, %s313
        $region44: #{ifm_forward.1} parent=39 // pred_fallthru
          _
        // Predicated region
        $region45: #{ifm_forward.1} parent=39 // pred_check
          %p315 = pneg %p64
        $region46: #{ifm_forward.1} parent=39 // pred_check_branch
          %317 = sbr.rel (%p315) target = $region48
        $region47: #{ifm_forward.1} parent=39 // pred_region
          %p318 = scmp.lt.s32.totalorder %s18, 1
          %s319 = scalar_select %p318, %s18, 1
          %s320 = smul.addr %s319, 3
          %s321 = smul.addr %s320, 4
          %s322 = scalar_lea.vmem %s1, %s321
        $region48: #{ifm_forward.1} parent=39 // pred_fallthru
          _
      $region40: #{ifm_forward.1} parent=5 // pred_fallthru
        _
      %p323 = scmp.le.s32.totalorder 1, %s18
      %p324 = scmp.lt.s32.totalorder %s18, 3
      %p325 = pnand %p323, %p324
      %p326 = pneg %p325
      // Predicated region
      $region49: #{ifm_forward.1} parent=5 // pred_check
        _
      $region50: #{ifm_forward.1} parent=5 // pred_check_branch
        %328 = sbr.rel (%p325) target = $region52
      $region51: #{ifm_forward.1} parent=5 // pred_region
        %s329 = ssub.s32 %s18, 1
        // Predicated region
        $region53: #{ifm_forward.1} parent=51 // pred_check
          %p330 = pneg %p133
        $region54: #{ifm_forward.1} parent=51 // pred_check_branch
          %332 = sbr.rel (%p330) target = $region56
        $region55: #{ifm_forward.1} parent=51 // pred_region
          %334 = dma.done [#allocation3], 9216
        $region56: #{ifm_forward.1} parent=51 // pred_fallthru
          _
        // Predicated region
        $region57: #{ifm_forward.1} parent=51 // pred_check
          %p335 = pneg %p175
        $region58: #{ifm_forward.1} parent=51 // pred_check_branch
          %337 = sbr.rel (%p335) target = $region60
        $region59: #{ifm_forward.1} parent=51 // pred_region
          %339 = dma.done [#allocation5], 6144
        $region60: #{ifm_forward.1} parent=51 // pred_fallthru
          _
        %p340 = scmp.lt.s32.totalorder %s23, 1
        %s341 = scalar_select %p340, %s23, 1
        %s342 = smul.addr %s341, 3
        %s343 = smul.addr %s342, 4
        %s344 = scalar_lea.vmem %s0, %s343
        %p345 = pneg %p44
        %p346 = pneg %p41
        %p347 = scmp.lt.s32.totalorder %s23, 1
        %s348 = scalar_select %p347, %s23, 1
        %s349 = smul.addr %s348, 3
        %s350 = smul.addr %s349, 4
        %s351 = scalar_lea.vmem %s1, %s350
        %p352 = pneg %p70
        %p353 = pneg %p67
        %p354 = pneg %p91
        %p355 = pneg %p88
        %p356 = pneg %p112
        %p357 = pneg %p109
        %p358 = pneg %p133
        %p359 = pneg %p130
        %p360 = pneg %p154
        %p361 = pneg %p151
        %p362 = pneg %p175
        %p363 = pneg %p172
        %p364 = pneg %p196
        %p365 = pneg %p193
        %p366 = pneg %p222
        %p367 = pneg %p219
        %p368 = scmp.lt.s32.totalorder %s23, 1
        %s369 = scalar_select %p368, %s23, 1
        %s370 = smul.addr %s369, 3
        %s371 = smul.addr %s370, 4
        %s372 = scalar_lea.vmem %s8, %s371
        %p373 = pneg %p248
        %p374 = pneg %p245
        %p375 = scmp.lt.s32.totalorder %s23, 1
        %s376 = scalar_select %p375, %s23, 1
        %s377 = smul.addr %s376, 3
        %s378 = smul.addr %s377, 4
        %s379 = scalar_lea.vmem %s9, %s378
        %p380 = scmp.lt.s32.totalorder %s23, 1
        %s381 = scalar_select %p380, %s23, 1
        %s382 = smul.addr %s381, 3
        %s383 = smul.addr %s382, 4
        %s384 = scalar_lea.vmem %s0, %s383
        %p385 = scmp.lt.s32.totalorder %s23, 1
        %s386 = scalar_select %p385, %s23, 1
        %s387 = smul.addr %s386, 3
        %s388 = smul.addr %s387, 4
        %s389 = scalar_lea.vmem %s1, %s388
        %p390 = scmp.lt.s32.totalorder %s23, 1
        %s391 = scalar_select %p390, %s23, 1
        %s392 = smul.addr %s391, 3
        %s393 = smul.addr %s392, 4
        %s394 = scalar_lea.vmem %s8, %s393
        %p395 = scmp.lt.s32.totalorder %s23, 1
        %s396 = scalar_select %p395, %s23, 1
        %s397 = smul.addr %s396, 3
        %s398 = smul.addr %s397, 4
        %s399 = scalar_lea.vmem %s9, %s398
        %v401 = vld [vmem:[%s384] sm:$0xf]
        %v402 = vld [vmem:[%s384 + $0x4] sm:$0xf]
        %v403 = vld [vmem:[%s384 + $0x8] sm:$0x1]
        %v404 = vld [vmem:[%s389] sm:$0xf]
        %v405 = vld [vmem:[%s389 + $0x4] sm:$0xf]
        %v406 = vld [vmem:[%s389 + $0x8] sm:$0x1]
        %v407 = vld [vmem:[%s2] sm:$0xf]
        %v408 = vld [vmem:[%s2 + $0x4] sm:$0xf]
        %v409 = vld [vmem:[%s2 + $0x8] sm:$0x1]
        %s410 = scalar_lea.vmem %s2, 12
        %v411 = vld [vmem:[%s410] sm:$0xf]
        %v412 = vld [vmem:[%s410 + $0x4] sm:$0xf]
        %v413 = vld [vmem:[%s410 + $0x8] sm:$0x1]
        %v417 = vunpack.c.l.b16 %v401
        %v418 = vunpack.c.l.b16 %v402
        %v419 = vunpack.c.l.b16 %v403
        %v420 = vpack.c.b16 %v418, %v417
        %v421 = vpack.c.b16 %v419, %v419
        %v426 = vunpack.c.l.b16 %v404
        %v427 = vunpack.c.l.b16 %v405
        %v428 = vunpack.c.l.b16 %v406
        %v429 = vpack.c.b16 %v427, %v426
        %v430 = vpack.c.b16 %v428, %v428
        %v435 = vunpack.c.l.b16 %v407
        %v436 = vunpack.c.l.b16 %v408
        %v437 = vunpack.c.l.b16 %v409
        %v438 = vpack.c.b16 %v436, %v435
        %v439 = vpack.c.b16 %v437, %v437
        %vm440 = vcmask 146432
        %v442 = vsel %vm440, %v438, 0
        %v445 = vsel %vm440, %v439, 0
        %vm447 = vcmask 1040384
        %v449 = vsel %vm447, %v421, 0
        %v452 = vsel %vm447, %v430, 0
        %454 = vmatpush.bf16.msra.mxu0 0
        %455 = vmatpush.bf16.msra.mxu0 0
        %456 = vmatpush.bf16.msra.mxu0 0
        %457 = vmatpush.bf16.msra.mxu0 0
        %458 = vmatpush.bf16.msra.mxu0 0
        %459 = vmatpush.bf16.msra.mxu0 0
        %460 = vmatpush.bf16.msra.mxu0 %v449
        %461 = vmatpush.bf16.msra.mxu0 %v420
        %462 = vmatmul.bf16.gmra.mxu0 %v442
        %v463 = vpop.f32.mrf.mxu0
        %v464 = vadd.f32 0.0, %v463
        %v465 = vpop.f32.mrf.mxu0
        %v466 = vadd.f32 0.0, %v465
        %467 = vmatmul.bf16.gmra.mxu0 %v445
        %v468 = vpop.f32.mrf.mxu0
        %v469 = vadd.f32 0.0, %v468
        %v470 = vpop.f32.mrf.mxu0
        %471 = vdwg.mxu0
        %472 = vmatpush.bf16.msra.mxu0 0
        %473 = vmatpush.bf16.msra.mxu0 0
        %474 = vmatpush.bf16.msra.mxu0 0
        %475 = vmatpush.bf16.msra.mxu0 0
        %476 = vmatpush.bf16.msra.mxu0 0
        %477 = vmatpush.bf16.msra.mxu0 0
        %478 = vmatpush.bf16.msra.mxu0 %v452
        %479 = vmatpush.bf16.msra.mxu0 %v429
        %480 = vmatmul.bf16.gmra.mxu0 %v442
        %v481 = vpop.f32.mrf.mxu0
        %v482 = vadd.f32 0.0, %v481
        %v483 = vpop.f32.mrf.mxu0
        %v484 = vadd.f32 0.0, %v483
        %485 = vmatmul.bf16.gmra.mxu0 %v445
        %v486 = vpop.f32.mrf.mxu0
        %v487 = vadd.f32 0.0, %v486
        %v488 = vpop.f32.mrf.mxu0
        %489 = vdwg.mxu0
        %v490 = vpack.c.bf16 %v482, %v464
        %v491 = vpack.c.bf16 %v484, %v466
        %v492 = vpack.c.bf16 %v487, %v469
        %v496 = vunpack.c.l.b16 %v411
        %v497 = vunpack.c.l.b16 %v412
        %v498 = vunpack.c.l.b16 %v413
        %v499 = vpack.c.b16 %v497, %v496
        %v500 = vpack.c.b16 %v498, %v498
        %v502 = vsel %vm440, %v499, 0
        %v505 = vsel %vm440, %v500, 0
        %507 = vmatpush.bf16.msra.mxu0 0
        %508 = vmatpush.bf16.msra.mxu0 0
        %509 = vmatpush.bf16.msra.mxu0 0
        %510 = vmatpush.bf16.msra.mxu0 0
        %511 = vmatpush.bf16.msra.mxu0 0
        %512 = vmatpush.bf16.msra.mxu0 0
        %513 = vmatpush.bf16.msra.mxu0 %v449
        %514 = vmatpush.bf16.msra.mxu0 %v420
        %515 = vmatmul.bf16.gmra.mxu0 %v502
        %v516 = vpop.f32.mrf.mxu0
        %v517 = vadd.f32 0.0, %v516
        %v518 = vpop.f32.mrf.mxu0
        %v519 = vadd.f32 0.0, %v518
        %520 = vmatmul.bf16.gmra.mxu0 %v505
        %v521 = vpop.f32.mrf.mxu0
        %v522 = vadd.f32 0.0, %v521
        %v523 = vpop.f32.mrf.mxu0
        %524 = vdwg.mxu0
        %525 = vmatpush.bf16.msra.mxu0 0
        %526 = vmatpush.bf16.msra.mxu0 0
        %527 = vmatpush.bf16.msra.mxu0 0
        %528 = vmatpush.bf16.msra.mxu0 0
        %529 = vmatpush.bf16.msra.mxu0 0
        %530 = vmatpush.bf16.msra.mxu0 0
        %531 = vmatpush.bf16.msra.mxu0 %v452
        %532 = vmatpush.bf16.msra.mxu0 %v429
        %533 = vmatmul.bf16.gmra.mxu0 %v502
        %v534 = vpop.f32.mrf.mxu0
        %v535 = vadd.f32 0.0, %v534
        %v536 = vpop.f32.mrf.mxu0
        %v537 = vadd.f32 0.0, %v536
        %538 = vmatmul.bf16.gmra.mxu0 %v505
        %v539 = vpop.f32.mrf.mxu0
        %v540 = vadd.f32 0.0, %v539
        %v541 = vpop.f32.mrf.mxu0
        %542 = vdwg.mxu0
        %v543 = vpack.c.bf16 %v535, %v517
        %v544 = vpack.c.bf16 %v537, %v519
        %v545 = vpack.c.bf16 %v540, %v522
        %v549 = vunpack.c.l.b16 %v490
        %v550 = vunpack.c.l.b16 %v491
        %v551 = vunpack.c.l.b16 %v492
        %v552 = vpack.c.b16 %v550, %v549
        %v553 = vpack.c.b16 %v551, %v551
        %v560 = vunpack.c.l.b16 %v543
        %v561 = vunpack.c.l.b16 %v544
        %v562 = vunpack.c.l.b16 %v545
        %v563 = vpack.c.b16 %v561, %v560
        %v564 = vpack.c.b16 %v562, %v562
        %v567 = vunpack.c.h.b16 %v490
        %v568 = vunpack.c.h.b16 %v491
        %v569 = vunpack.c.h.b16 %v492
        %v570 = vpack.c.b16 %v568, %v567
        %v571 = vpack.c.b16 %v569, %v569
        %v575 = vunpack.c.h.b16 %v543
        %v576 = vunpack.c.h.b16 %v544
        %v577 = vunpack.c.h.b16 %v545
        %v578 = vpack.c.b16 %v576, %v575
        %v579 = vpack.c.b16 %v577, %v577
        %v582 = vld [vmem:[%s3] sm:$0xff]
        %v583 = vld [vmem:[%s3 + $0x8] sm:$0xf]
        %v584 = vld [vmem:[%s3 + $0xc] sm:$0xff]
        %v585 = vld [vmem:[%s3 + $0x14] sm:$0xf]
        %v586 = vld [vmem:[%s3 + $0x18] sm:$0xff]
        %v587 = vld [vmem:[%s3 + $0x20] sm:$0xf]
        %v588 = vld [vmem:[%s3 + $0x24] sm:$0xff]
        %v589 = vld [vmem:[%s3 + $0x2c] sm:$0xf]
        %v590 = vld [vmem:[%s3 + $0x30] sm:$0xff]
        %v591 = vld [vmem:[%s3 + $0x38] sm:$0xf]
        %v592 = vld [vmem:[%s3 + $0x3c] sm:$0xff]
        %v593 = vld [vmem:[%s3 + $0x44] sm:$0xf]
        %v594 = vld [vmem:[%s3 + $0x48] sm:$0xff]
        %v595 = vld [vmem:[%s3 + $0x50] sm:$0xf]
        %v596 = vld [vmem:[%s3 + $0x54] sm:$0xff]
        %v597 = vld [vmem:[%s3 + $0x5c] sm:$0xf]
        %v598 = vld [vmem:[%s3 + $0x60] sm:$0xff]
        %v599 = vld [vmem:[%s3 + $0x68] sm:$0xf]
        %v600 = vld [vmem:[%s3 + $0x6c] sm:$0xff]
        %v601 = vld [vmem:[%s3 + $0x74] sm:$0xf]
        %v602 = vld [vmem:[%s3 + $0x78] sm:$0xff]
        %v603 = vld [vmem:[%s3 + $0x80] sm:$0xf]
        %v604 = vld [vmem:[%s3 + $0x84] sm:$0xff]
        %v605 = vld [vmem:[%s3 + $0x8c] sm:$0xf]
        %v606 = vld [vmem:[%s3 + $0x90] sm:$0xff]
        %v607 = vld [vmem:[%s3 + $0x98] sm:$0xf]
        %v608 = vld [vmem:[%s3 + $0x9c] sm:$0xff]
        %v609 = vld [vmem:[%s3 + $0xa4] sm:$0xf]
        %v610 = vld [vmem:[%s3 + $0xa8] sm:$0xff]
        %v611 = vld [vmem:[%s3 + $0xb0] sm:$0xf]
        %v612 = vld [vmem:[%s3 + $0xb4] sm:$0xff]
        %v613 = vld [vmem:[%s3 + $0xbc] sm:$0xf]
        %v614 = vld [vmem:[%s3 + $0xc0] sm:$0xff]
        %v615 = vld [vmem:[%s3 + $0xc8] sm:$0xf]
        %v616 = vld [vmem:[%s3 + $0xcc] sm:$0xff]
        %v617 = vld [vmem:[%s3 + $0xd4] sm:$0xf]
        %v618 = vld [vmem:[%s3 + $0xd8] sm:$0xff]
        %v619 = vld [vmem:[%s3 + $0xe0] sm:$0xf]
        %v620 = vld [vmem:[%s3 + $0xe4] sm:$0xff]
        %v621 = vld [vmem:[%s3 + $0xec] sm:$0xf]
        %v622 = vld [vmem:[%s3 + $0xf0] sm:$0xff]
        %v623 = vld [vmem:[%s3 + $0xf8] sm:$0xf]
        %v624 = vld [vmem:[%s3 + $0xfc] sm:$0xff]
        %v625 = vld [vmem:[%s3 + $0x104] sm:$0xf]
        %v626 = vld [vmem:[%s3 + $0x108] sm:$0xff]
        %v627 = vld [vmem:[%s3 + $0x110] sm:$0xf]
        %v628 = vld [vmem:[%s3 + $0x114] sm:$0xff]
        %v629 = vld [vmem:[%s3 + $0x11c] sm:$0xf]
        %v630 = vld [vmem:[%s3 + $0x120] sm:$0xff]
        %v631 = vld [vmem:[%s3 + $0x128] sm:$0xf]
        %v632 = vld [vmem:[%s3 + $0x12c] sm:$0xff]
        %v633 = vld [vmem:[%s3 + $0x134] sm:$0xf]
        %v634 = vld [vmem:[%s3 + $0x138] sm:$0xff]
        %v635 = vld [vmem:[%s3 + $0x140] sm:$0xf]
        %v636 = vld [vmem:[%s3 + $0x144] sm:$0xff]
        %v637 = vld [vmem:[%s3 + $0x14c] sm:$0xf]
        %v638 = vld [vmem:[%s3 + $0x150] sm:$0xff]
        %v639 = vld [vmem:[%s3 + $0x158] sm:$0xf]
        %v640 = vld [vmem:[%s3 + $0x15c] sm:$0xff]
        %v641 = vld [vmem:[%s3 + $0x164] sm:$0xf]
        %v642 = vld [vmem:[%s3 + $0x168] sm:$0xff]
        %v643 = vld [vmem:[%s3 + $0x170] sm:$0xf]
        %v644 = vld [vmem:[%s3 + $0x174] sm:$0xff]
        %v645 = vld [vmem:[%s3 + $0x17c] sm:$0xf]
        %v646 = vld [vmem:[%s3 + $0x180] sm:$0xff]
        %v647 = vld [vmem:[%s3 + $0x188] sm:$0xf]
        %v648 = vld [vmem:[%s3 + $0x18c] sm:$0xff]
        %v649 = vld [vmem:[%s3 + $0x194] sm:$0xf]
        %v650 = vld [vmem:[%s3 + $0x198] sm:$0xff]
        %v651 = vld [vmem:[%s3 + $0x1a0] sm:$0xf]
        %v652 = vld [vmem:[%s3 + $0x1a4] sm:$0xff]
        %v653 = vld [vmem:[%s3 + $0x1ac] sm:$0xf]
        %v654 = vld [vmem:[%s3 + $0x1b0] sm:$0xff]
        %v655 = vld [vmem:[%s3 + $0x1b8] sm:$0xf]
        %v656 = vld [vmem:[%s3 + $0x1bc] sm:$0xff]
        %v657 = vld [vmem:[%s3 + $0x1c4] sm:$0xf]
        %v658 = vld [vmem:[%s3 + $0x1c8] sm:$0xff]
        %v659 = vld [vmem:[%s3 + $0x1d0] sm:$0xf]
        %v660 = vld [vmem:[%s3 + $0x1d4] sm:$0xff]
        %v661 = vld [vmem:[%s3 + $0x1dc] sm:$0xf]
        %v662 = vld [vmem:[%s3 + $0x1e0] sm:$0xff]
        %v663 = vld [vmem:[%s3 + $0x1e8] sm:$0xf]
        %v664 = vld [vmem:[%s3 + $0x1ec] sm:$0xff]
        %v665 = vld [vmem:[%s3 + $0x1f4] sm:$0xf]
        %v666 = vld [vmem:[%s3 + $0x1f8] sm:$0xff]
        %v667 = vld [vmem:[%s3 + $0x200] sm:$0xf]
        %v668 = vld [vmem:[%s3 + $0x204] sm:$0xff]
        %v669 = vld [vmem:[%s3 + $0x20c] sm:$0xf]
        %v670 = vld [vmem:[%s3 + $0x210] sm:$0xff]
        %v671 = vld [vmem:[%s3 + $0x218] sm:$0xf]
        %v672 = vld [vmem:[%s3 + $0x21c] sm:$0xff]
        %v673 = vld [vmem:[%s3 + $0x224] sm:$0xf]
        %v674 = vld [vmem:[%s3 + $0x228] sm:$0xff]
        %v675 = vld [vmem:[%s3 + $0x230] sm:$0xf]
        %v676 = vld [vmem:[%s3 + $0x234] sm:$0xff]
        %v677 = vld [vmem:[%s3 + $0x23c] sm:$0xf]
        %v774 = vunpack.c.l.b16 %v582
        %v775 = vunpack.c.h.b16 %v582
        %v776 = vunpack.c.l.b16 %v583
        %v777 = vunpack.c.l.b16 %v584
        %v778 = vunpack.c.h.b16 %v584
        %v779 = vunpack.c.l.b16 %v585
        %v780 = vunpack.c.l.b16 %v586
        %v781 = vunpack.c.h.b16 %v586
        %v782 = vunpack.c.l.b16 %v587
        %v783 = vunpack.c.l.b16 %v588
        %v784 = vunpack.c.h.b16 %v588
        %v785 = vunpack.c.l.b16 %v589
        %v786 = vunpack.c.l.b16 %v590
        %v787 = vunpack.c.h.b16 %v590
        %v788 = vunpack.c.l.b16 %v591
        %v789 = vunpack.c.l.b16 %v592
        %v790 = vunpack.c.h.b16 %v592
        %v791 = vunpack.c.l.b16 %v593
        %v792 = vunpack.c.l.b16 %v594
        %v793 = vunpack.c.h.b16 %v594
        %v794 = vunpack.c.l.b16 %v595
        %v795 = vunpack.c.l.b16 %v596
        %v796 = vunpack.c.h.b16 %v596
        %v797 = vunpack.c.l.b16 %v597
        %v798 = vunpack.c.l.b16 %v598
        %v799 = vunpack.c.h.b16 %v598
        %v800 = vunpack.c.l.b16 %v599
        %v801 = vunpack.c.l.b16 %v600
        %v802 = vunpack.c.h.b16 %v600
        %v803 = vunpack.c.l.b16 %v601
        %v804 = vunpack.c.l.b16 %v602
        %v805 = vunpack.c.h.b16 %v602
        %v806 = vunpack.c.l.b16 %v603
        %v807 = vunpack.c.l.b16 %v604
        %v808 = vunpack.c.h.b16 %v604
        %v809 = vunpack.c.l.b16 %v605
        %v810 = vunpack.c.l.b16 %v606
        %v811 = vunpack.c.h.b16 %v606
        %v812 = vunpack.c.l.b16 %v607
        %v813 = vunpack.c.l.b16 %v608
        %v814 = vunpack.c.h.b16 %v608
        %v815 = vunpack.c.l.b16 %v609
        %v816 = vunpack.c.l.b16 %v610
        %v817 = vunpack.c.h.b16 %v610
        %v818 = vunpack.c.l.b16 %v611
        %v819 = vunpack.c.l.b16 %v612
        %v820 = vunpack.c.h.b16 %v612
        %v821 = vunpack.c.l.b16 %v613
        %v822 = vunpack.c.l.b16 %v614
        %v823 = vunpack.c.h.b16 %v614
        %v824 = vunpack.c.l.b16 %v615
        %v825 = vunpack.c.l.b16 %v616
        %v826 = vunpack.c.h.b16 %v616
        %v827 = vunpack.c.l.b16 %v617
        %v828 = vunpack.c.l.b16 %v618
        %v829 = vunpack.c.h.b16 %v618
        %v830 = vunpack.c.l.b16 %v619
        %v831 = vunpack.c.l.b16 %v620
        %v832 = vunpack.c.h.b16 %v620
        %v833 = vunpack.c.l.b16 %v621
        %v834 = vunpack.c.l.b16 %v622
        %v835 = vunpack.c.h.b16 %v622
        %v836 = vunpack.c.l.b16 %v623
        %v837 = vunpack.c.l.b16 %v624
        %v838 = vunpack.c.h.b16 %v624
        %v839 = vunpack.c.l.b16 %v625
        %v840 = vunpack.c.l.b16 %v626
        %v841 = vunpack.c.h.b16 %v626
        %v842 = vunpack.c.l.b16 %v627
        %v843 = vunpack.c.l.b16 %v628
        %v844 = vunpack.c.h.b16 %v628
        %v845 = vunpack.c.l.b16 %v629
        %v846 = vunpack.c.l.b16 %v630
        %v847 = vunpack.c.h.b16 %v630
        %v848 = vunpack.c.l.b16 %v631
        %v849 = vunpack.c.l.b16 %v632
        %v850 = vunpack.c.h.b16 %v632
        %v851 = vunpack.c.l.b16 %v633
        %v852 = vunpack.c.l.b16 %v634
        %v853 = vunpack.c.h.b16 %v634
        %v854 = vunpack.c.l.b16 %v635
        %v855 = vunpack.c.l.b16 %v636
        %v856 = vunpack.c.h.b16 %v636
        %v857 = vunpack.c.l.b16 %v637
        %v858 = vunpack.c.l.b16 %v638
        %v859 = vunpack.c.h.b16 %v638
        %v860 = vunpack.c.l.b16 %v639
        %v861 = vunpack.c.l.b16 %v640
        %v862 = vunpack.c.h.b16 %v640
        %v863 = vunpack.c.l.b16 %v641
        %v864 = vunpack.c.l.b16 %v642
        %v865 = vunpack.c.h.b16 %v642
        %v866 = vunpack.c.l.b16 %v643
        %v867 = vunpack.c.l.b16 %v644
        %v868 = vunpack.c.h.b16 %v644
        %v869 = vunpack.c.l.b16 %v645
        %v870 = vunpack.c.l.b16 %v646
        %v871 = vunpack.c.h.b16 %v646
        %v872 = vunpack.c.l.b16 %v647
        %v873 = vunpack.c.l.b16 %v648
        %v874 = vunpack.c.h.b16 %v648
        %v875 = vunpack.c.l.b16 %v649
        %v876 = vunpack.c.l.b16 %v650
        %v877 = vunpack.c.h.b16 %v650
        %v878 = vunpack.c.l.b16 %v651
        %v879 = vunpack.c.l.b16 %v652
        %v880 = vunpack.c.h.b16 %v652
        %v881 = vunpack.c.l.b16 %v653
        %v882 = vunpack.c.l.b16 %v654
        %v883 = vunpack.c.h.b16 %v654
        %v884 = vunpack.c.l.b16 %v655
        %v885 = vunpack.c.l.b16 %v656
        %v886 = vunpack.c.h.b16 %v656
        %v887 = vunpack.c.l.b16 %v657
        %v888 = vunpack.c.l.b16 %v658
        %v889 = vunpack.c.h.b16 %v658
        %v890 = vunpack.c.l.b16 %v659
        %v891 = vunpack.c.l.b16 %v660
        %v892 = vunpack.c.h.b16 %v660
        %v893 = vunpack.c.l.b16 %v661
        %v894 = vunpack.c.l.b16 %v662
        %v895 = vunpack.c.h.b16 %v662
        %v896 = vunpack.c.l.b16 %v663
        %v897 = vunpack.c.l.b16 %v664
        %v898 = vunpack.c.h.b16 %v664
        %v899 = vunpack.c.l.b16 %v665
        %v900 = vunpack.c.l.b16 %v666
        %v901 = vunpack.c.h.b16 %v666
        %v902 = vunpack.c.l.b16 %v667
        %v903 = vunpack.c.l.b16 %v668
        %v904 = vunpack.c.h.b16 %v668
        %v905 = vunpack.c.l.b16 %v669
        %v906 = vunpack.c.l.b16 %v670
        %v907 = vunpack.c.h.b16 %v670
        %v908 = vunpack.c.l.b16 %v671
        %v909 = vunpack.c.l.b16 %v672
        %v910 = vunpack.c.h.b16 %v672
        %v911 = vunpack.c.l.b16 %v673
        %v912 = vunpack.c.l.b16 %v674
        %v913 = vunpack.c.h.b16 %v674
        %v914 = vunpack.c.l.b16 %v675
        %v915 = vunpack.c.l.b16 %v676
        %v916 = vunpack.c.h.b16 %v676
        %v917 = vunpack.c.l.b16 %v677
        %v918 = vpack.c.b16 %v777, %v774
        %v919 = vpack.c.b16 %v778, %v775
        %v920 = vpack.c.b16 %v779, %v776
        %v921 = vpack.c.b16 %v783, %v780
        %v922 = vpack.c.b16 %v784, %v781
        %v923 = vpack.c.b16 %v785, %v782
        %v924 = vpack.c.b16 %v789, %v786
        %v925 = vpack.c.b16 %v790, %v787
        %v926 = vpack.c.b16 %v791, %v788
        %v927 = vpack.c.b16 %v795, %v792
        %v928 = vpack.c.b16 %v796, %v793
        %v929 = vpack.c.b16 %v797, %v794
        %v930 = vpack.c.b16 %v801, %v798
        %v931 = vpack.c.b16 %v802, %v799
        %v932 = vpack.c.b16 %v803, %v800
        %v933 = vpack.c.b16 %v807, %v804
        %v934 = vpack.c.b16 %v808, %v805
        %v935 = vpack.c.b16 %v809, %v806
        %v936 = vpack.c.b16 %v813, %v810
        %v937 = vpack.c.b16 %v814, %v811
        %v938 = vpack.c.b16 %v815, %v812
        %v939 = vpack.c.b16 %v819, %v816
        %v940 = vpack.c.b16 %v820, %v817
        %v941 = vpack.c.b16 %v821, %v818
        %v942 = vpack.c.b16 %v825, %v822
        %v943 = vpack.c.b16 %v826, %v823
        %v944 = vpack.c.b16 %v827, %v824
        %v945 = vpack.c.b16 %v831, %v828
        %v946 = vpack.c.b16 %v832, %v829
        %v947 = vpack.c.b16 %v833, %v830
        %v948 = vpack.c.b16 %v837, %v834
        %v949 = vpack.c.b16 %v838, %v835
        %v950 = vpack.c.b16 %v839, %v836
        %v951 = vpack.c.b16 %v843, %v840
        %v952 = vpack.c.b16 %v844, %v841
        %v953 = vpack.c.b16 %v845, %v842
        %v954 = vpack.c.b16 %v849, %v846
        %v955 = vpack.c.b16 %v850, %v847
        %v956 = vpack.c.b16 %v851, %v848
        %v957 = vpack.c.b16 %v855, %v852
        %v958 = vpack.c.b16 %v856, %v853
        %v959 = vpack.c.b16 %v857, %v854
        %v960 = vpack.c.b16 %v861, %v858
        %v961 = vpack.c.b16 %v862, %v859
        %v962 = vpack.c.b16 %v863, %v860
        %v963 = vpack.c.b16 %v867, %v864
        %v964 = vpack.c.b16 %v868, %v865
        %v965 = vpack.c.b16 %v869, %v866
        %v966 = vpack.c.b16 %v873, %v870
        %v967 = vpack.c.b16 %v874, %v871
        %v968 = vpack.c.b16 %v875, %v872
        %v969 = vpack.c.b16 %v879, %v876
        %v970 = vpack.c.b16 %v880, %v877
        %v971 = vpack.c.b16 %v881, %v878
        %v972 = vpack.c.b16 %v885, %v882
        %v973 = vpack.c.b16 %v886, %v883
        %v974 = vpack.c.b16 %v887, %v884
        %v975 = vpack.c.b16 %v891, %v888
        %v976 = vpack.c.b16 %v892, %v889
        %v977 = vpack.c.b16 %v893, %v890
        %v978 = vpack.c.b16 %v897, %v894
        %v979 = vpack.c.b16 %v898, %v895
        %v980 = vpack.c.b16 %v899, %v896
        %v981 = vpack.c.b16 %v903, %v900
        %v982 = vpack.c.b16 %v904, %v901
        %v983 = vpack.c.b16 %v905, %v902
        %v984 = vpack.c.b16 %v909, %v906
        %v985 = vpack.c.b16 %v910, %v907
        %v986 = vpack.c.b16 %v911, %v908
        %v987 = vpack.c.b16 %v915, %v912
        %v988 = vpack.c.b16 %v916, %v913
        %v989 = vpack.c.b16 %v917, %v914
        %1062 = vmatpush.bf16.msra.mxu0 %v939
        %1063 = vmatpush.bf16.msra.mxu0 %v936
        %1064 = vmatpush.bf16.msra.mxu0 %v933
        %1065 = vmatpush.bf16.msra.mxu0 %v930
        %1066 = vmatpush.bf16.msra.mxu0 %v927
        %1067 = vmatpush.bf16.msra.mxu0 %v924
        %1068 = vmatpush.bf16.msra.mxu0 %v921
        %1069 = vmatpush.bf16.msra.mxu0 %v918
        %1070 = vmatmul.bf16.gmra.mxu0 %v552
        %v1071 = vpop.f32.mrf.mxu0
        %v1072 = vadd.f32 0.0, %v1071
        %v1073 = vpop.f32.mrf.mxu0
        %v1074 = vadd.f32 0.0, %v1073
        %1075 = vmatmul.bf16.gmra.mxu0 %v553
        %v1076 = vpop.f32.mrf.mxu0
        %v1077 = vadd.f32 0.0, %v1076
        %v1078 = vpop.f32.mrf.mxu0
        %1079 = vdwg.mxu0
        %1080 = vmatpush.bf16.msra.mxu0 %v963
        %1081 = vmatpush.bf16.msra.mxu0 %v960
        %1082 = vmatpush.bf16.msra.mxu0 %v957
        %1083 = vmatpush.bf16.msra.mxu0 %v954
        %1084 = vmatpush.bf16.msra.mxu0 %v951
        %1085 = vmatpush.bf16.msra.mxu0 %v948
        %1086 = vmatpush.bf16.msra.mxu0 %v945
        %1087 = vmatpush.bf16.msra.mxu0 %v942
        %1088 = vmatmul.bf16.gmra.mxu0 %v420
        %v1089 = vpop.f32.mrf.mxu0
        %v1090 = vadd.f32 %v1072, %v1089
        %v1091 = vpop.f32.mrf.mxu0
        %v1092 = vadd.f32 %v1074, %v1091
        %1093 = vmatmul.bf16.gmra.mxu0 %v421
        %v1094 = vpop.f32.mrf.mxu0
        %v1095 = vadd.f32 %v1077, %v1094
        %v1096 = vpop.f32.mrf.mxu0
        %1097 = vdwg.mxu0
        %1098 = vmatpush.bf16.msra.mxu0 %v987
        %1099 = vmatpush.bf16.msra.mxu0 %v984
        %1100 = vmatpush.bf16.msra.mxu0 %v981
        %1101 = vmatpush.bf16.msra.mxu0 %v978
        %1102 = vmatpush.bf16.msra.mxu0 %v975
        %1103 = vmatpush.bf16.msra.mxu0 %v972
        %1104 = vmatpush.bf16.msra.mxu0 %v969
        %1105 = vmatpush.bf16.msra.mxu0 %v966
        %1106 = vmatmul.bf16.gmra.mxu0 %v563
        %v1107 = vpop.f32.mrf.mxu0
        %v1108 = vadd.f32 %v1090, %v1107
        %v1109 = vpop.f32.mrf.mxu0
        %v1110 = vadd.f32 %v1092, %v1109
        %1111 = vmatmul.bf16.gmra.mxu0 %v564
        %v1112 = vpop.f32.mrf.mxu0
        %v1113 = vadd.f32 %v1095, %v1112
        %v1114 = vpop.f32.mrf.mxu0
        %1115 = vdwg.mxu0
        %1116 = vmatpush.bf16.msra.mxu0 %v940
        %1117 = vmatpush.bf16.msra.mxu0 %v937
        %1118 = vmatpush.bf16.msra.mxu0 %v934
        %1119 = vmatpush.bf16.msra.mxu0 %v931
        %1120 = vmatpush.bf16.msra.mxu0 %v928
        %1121 = vmatpush.bf16.msra.mxu0 %v925
        %1122 = vmatpush.bf16.msra.mxu0 %v922
        %1123 = vmatpush.bf16.msra.mxu0 %v919
        %1124 = vmatmul.bf16.gmra.mxu0 %v552
        %v1125 = vpop.f32.mrf.mxu0
        %v1126 = vadd.f32 0.0, %v1125
        %v1127 = vpop.f32.mrf.mxu0
        %v1128 = vadd.f32 0.0, %v1127
        %1129 = vmatmul.bf16.gmra.mxu0 %v553
        %v1130 = vpop.f32.mrf.mxu0
        %v1131 = vadd.f32 0.0, %v1130
        %v1132 = vpop.f32.mrf.mxu0
        %1133 = vdwg.mxu0
        %1134 = vmatpush.bf16.msra.mxu0 %v964
        %1135 = vmatpush.bf16.msra.mxu0 %v961
        %1136 = vmatpush.bf16.msra.mxu0 %v958
        %1137 = vmatpush.bf16.msra.mxu0 %v955
        %1138 = vmatpush.bf16.msra.mxu0 %v952
        %1139 = vmatpush.bf16.msra.mxu0 %v949
        %1140 = vmatpush.bf16.msra.mxu0 %v946
        %1141 = vmatpush.bf16.msra.mxu0 %v943
        %1142 = vmatmul.bf16.gmra.mxu0 %v420
        %v1143 = vpop.f32.mrf.mxu0
        %v1144 = vadd.f32 %v1126, %v1143
        %v1145 = vpop.f32.mrf.mxu0
        %v1146 = vadd.f32 %v1128, %v1145
        %1147 = vmatmul.bf16.gmra.mxu0 %v421
        %v1148 = vpop.f32.mrf.mxu0
        %v1149 = vadd.f32 %v1131, %v1148
        %v1150 = vpop.f32.mrf.mxu0
        %1151 = vdwg.mxu0
        %1152 = vmatpush.bf16.msra.mxu0 %v988
        %1153 = vmatpush.bf16.msra.mxu0 %v985
        %1154 = vmatpush.bf16.msra.mxu0 %v982
        %1155 = vmatpush.bf16.msra.mxu0 %v979
        %1156 = vmatpush.bf16.msra.mxu0 %v976
        %1157 = vmatpush.bf16.msra.mxu0 %v973
        %1158 = vmatpush.bf16.msra.mxu0 %v970
        %1159 = vmatpush.bf16.msra.mxu0 %v967
        %1160 = vmatmul.bf16.gmra.mxu0 %v563
        %v1161 = vpop.f32.mrf.mxu0
        %v1162 = vadd.f32 %v1144, %v1161
        %v1163 = vpop.f32.mrf.mxu0
        %v1164 = vadd.f32 %v1146, %v1163
        %1165 = vmatmul.bf16.gmra.mxu0 %v564
        %v1166 = vpop.f32.mrf.mxu0
        %v1167 = vadd.f32 %v1149, %v1166
        %v1168 = vpop.f32.mrf.mxu0
        %1169 = vdwg.mxu0
        %1170 = vmatpush.bf16.msra.mxu0 %v941
        %1171 = vmatpush.bf16.msra.mxu0 %v938
        %1172 = vmatpush.bf16.msra.mxu0 %v935
        %1173 = vmatpush.bf16.msra.mxu0 %v932
        %1174 = vmatpush.bf16.msra.mxu0 %v929
        %1175 = vmatpush.bf16.msra.mxu0 %v926
        %1176 = vmatpush.bf16.msra.mxu0 %v923
        %1177 = vmatpush.bf16.msra.mxu0 %v920
        %1178 = vmatmul.bf16.gmra.mxu0 %v552
        %v1179 = vpop.f32.mrf.mxu0
        %v1180 = vadd.f32 0.0, %v1179
        %v1181 = vpop.f32.mrf.mxu0
        %v1182 = vadd.f32 0.0, %v1181
        %1183 = vmatmul.bf16.gmra.mxu0 %v553
        %v1184 = vpop.f32.mrf.mxu0
        %v1185 = vadd.f32 0.0, %v1184
        %v1186 = vpop.f32.mrf.mxu0
        %1187 = vdwg.mxu0
        %1188 = vmatpush.bf16.msra.mxu0 %v965
        %1189 = vmatpush.bf16.msra.mxu0 %v962
        %1190 = vmatpush.bf16.msra.mxu0 %v959
        %1191 = vmatpush.bf16.msra.mxu0 %v956
        %1192 = vmatpush.bf16.msra.mxu0 %v953
        %1193 = vmatpush.bf16.msra.mxu0 %v950
        %1194 = vmatpush.bf16.msra.mxu0 %v947
        %1195 = vmatpush.bf16.msra.mxu0 %v944
        %1196 = vmatmul.bf16.gmra.mxu0 %v420
        %v1197 = vpop.f32.mrf.mxu0
        %v1198 = vadd.f32 %v1180, %v1197
        %v1199 = vpop.f32.mrf.mxu0
        %v1200 = vadd.f32 %v1182, %v1199
        %1201 = vmatmul.bf16.gmra.mxu0 %v421
        %v1202 = vpop.f32.mrf.mxu0
        %v1203 = vadd.f32 %v1185, %v1202
        %v1204 = vpop.f32.mrf.mxu0
        %1205 = vdwg.mxu0
        %1206 = vmatpush.bf16.msra.mxu0 %v989
        %1207 = vmatpush.bf16.msra.mxu0 %v986
        %1208 = vmatpush.bf16.msra.mxu0 %v983
        %1209 = vmatpush.bf16.msra.mxu0 %v980
        %1210 = vmatpush.bf16.msra.mxu0 %v977
        %1211 = vmatpush.bf16.msra.mxu0 %v974
        %1212 = vmatpush.bf16.msra.mxu0 %v971
        %1213 = vmatpush.bf16.msra.mxu0 %v968
        %1214 = vmatmul.bf16.gmra.mxu0 %v563
        %v1215 = vpop.f32.mrf.mxu0
        %v1216 = vadd.f32 %v1198, %v1215
        %v1217 = vpop.f32.mrf.mxu0
        %v1218 = vadd.f32 %v1200, %v1217
        %1219 = vmatmul.bf16.gmra.mxu0 %v564
        %v1220 = vpop.f32.mrf.mxu0
        %v1221 = vadd.f32 %v1203, %v1220
        %v1222 = vpop.f32.mrf.mxu0
        %1223 = vdwg.mxu0
        %v1224 = vld [vmem:[#allocation2] sm:$0xff]
        %v1225 = vld [vmem:[#allocation2 + $0x8] sm:$0xf]
        %v1226 = vld [vmem:[#allocation2 + $0xc] sm:$0xff]
        %v1227 = vld [vmem:[#allocation2 + $0x14] sm:$0xf]
        %v1228 = vld [vmem:[#allocation2 + $0x18] sm:$0xff]
        %v1229 = vld [vmem:[#allocation2 + $0x20] sm:$0xf]
        %v1230 = vld [vmem:[#allocation2 + $0x24] sm:$0xff]
        %v1231 = vld [vmem:[#allocation2 + $0x2c] sm:$0xf]
        %v1232 = vld [vmem:[#allocation2 + $0x30] sm:$0xff]
        %v1233 = vld [vmem:[#allocation2 + $0x38] sm:$0xf]
        %v1234 = vld [vmem:[#allocation2 + $0x3c] sm:$0xff]
        %v1235 = vld [vmem:[#allocation2 + $0x44] sm:$0xf]
        %v1236 = vld [vmem:[#allocation2 + $0x48] sm:$0xff]
        %v1237 = vld [vmem:[#allocation2 + $0x50] sm:$0xf]
        %v1238 = vld [vmem:[#allocation2 + $0x54] sm:$0xff]
        %v1239 = vld [vmem:[#allocation2 + $0x5c] sm:$0xf]
        %v1240 = vld [vmem:[#allocation2 + $0x60] sm:$0xff]
        %v1241 = vld [vmem:[#allocation2 + $0x68] sm:$0xf]
        %v1242 = vld [vmem:[#allocation2 + $0x6c] sm:$0xff]
        %v1243 = vld [vmem:[#allocation2 + $0x74] sm:$0xf]
        %v1244 = vld [vmem:[#allocation2 + $0x78] sm:$0xff]
        %v1245 = vld [vmem:[#allocation2 + $0x80] sm:$0xf]
        %v1246 = vld [vmem:[#allocation2 + $0x84] sm:$0xff]
        %v1247 = vld [vmem:[#allocation2 + $0x8c] sm:$0xf]
        %v1248 = vld [vmem:[#allocation2 + $0x90] sm:$0xff]
        %v1249 = vld [vmem:[#allocation2 + $0x98] sm:$0xf]
        %v1250 = vld [vmem:[#allocation2 + $0x9c] sm:$0xff]
        %v1251 = vld [vmem:[#allocation2 + $0xa4] sm:$0xf]
        %v1252 = vld [vmem:[#allocation2 + $0xa8] sm:$0xff]
        %v1253 = vld [vmem:[#allocation2 + $0xb0] sm:$0xf]
        %v1254 = vld [vmem:[#allocation2 + $0xb4] sm:$0xff]
        %v1255 = vld [vmem:[#allocation2 + $0xbc] sm:$0xf]
        %v1256 = vld [vmem:[#allocation2 + $0xc0] sm:$0xff]
        %v1257 = vld [vmem:[#allocation2 + $0xc8] sm:$0xf]
        %v1258 = vld [vmem:[#allocation2 + $0xcc] sm:$0xff]
        %v1259 = vld [vmem:[#allocation2 + $0xd4] sm:$0xf]
        %v1260 = vld [vmem:[#allocation2 + $0xd8] sm:$0xff]
        %v1261 = vld [vmem:[#allocation2 + $0xe0] sm:$0xf]
        %v1262 = vld [vmem:[#allocation2 + $0xe4] sm:$0xff]
        %v1263 = vld [vmem:[#allocation2 + $0xec] sm:$0xf]
        %v1264 = vld [vmem:[#allocation2 + $0xf0] sm:$0xff]
        %v1265 = vld [vmem:[#allocation2 + $0xf8] sm:$0xf]
        %v1266 = vld [vmem:[#allocation2 + $0xfc] sm:$0xff]
        %v1267 = vld [vmem:[#allocation2 + $0x104] sm:$0xf]
        %v1268 = vld [vmem:[#allocation2 + $0x108] sm:$0xff]
        %v1269 = vld [vmem:[#allocation2 + $0x110] sm:$0xf]
        %v1270 = vld [vmem:[#allocation2 + $0x114] sm:$0xff]
        %v1271 = vld [vmem:[#allocation2 + $0x11c] sm:$0xf]
        %v1272 = vld [vmem:[#allocation2 + $0x120] sm:$0xff]
        %v1273 = vld [vmem:[#allocation2 + $0x128] sm:$0xf]
        %v1274 = vld [vmem:[#allocation2 + $0x12c] sm:$0xff]
        %v1275 = vld [vmem:[#allocation2 + $0x134] sm:$0xf]
        %v1276 = vld [vmem:[#allocation2 + $0x138] sm:$0xff]
        %v1277 = vld [vmem:[#allocation2 + $0x140] sm:$0xf]
        %v1278 = vld [vmem:[#allocation2 + $0x144] sm:$0xff]
        %v1279 = vld [vmem:[#allocation2 + $0x14c] sm:$0xf]
        %v1280 = vld [vmem:[#allocation2 + $0x150] sm:$0xff]
        %v1281 = vld [vmem:[#allocation2 + $0x158] sm:$0xf]
        %v1282 = vld [vmem:[#allocation2 + $0x15c] sm:$0xff]
        %v1283 = vld [vmem:[#allocation2 + $0x164] sm:$0xf]
        %v1284 = vld [vmem:[#allocation2 + $0x168] sm:$0xff]
        %v1285 = vld [vmem:[#allocation2 + $0x170] sm:$0xf]
        %v1286 = vld [vmem:[#allocation2 + $0x174] sm:$0xff]
        %v1287 = vld [vmem:[#allocation2 + $0x17c] sm:$0xf]
        %v1288 = vld [vmem:[#allocation2 + $0x180] sm:$0xff]
        %v1289 = vld [vmem:[#allocation2 + $0x188] sm:$0xf]
        %v1290 = vld [vmem:[#allocation2 + $0x18c] sm:$0xff]
        %v1291 = vld [vmem:[#allocation2 + $0x194] sm:$0xf]
        %v1292 = vld [vmem:[#allocation2 + $0x198] sm:$0xff]
        %v1293 = vld [vmem:[#allocation2 + $0x1a0] sm:$0xf]
        %v1294 = vld [vmem:[#allocation2 + $0x1a4] sm:$0xff]
        %v1295 = vld [vmem:[#allocation2 + $0x1ac] sm:$0xf]
        %v1296 = vld [vmem:[#allocation2 + $0x1b0] sm:$0xff]
        %v1297 = vld [vmem:[#allocation2 + $0x1b8] sm:$0xf]
        %v1298 = vld [vmem:[#allocation2 + $0x1bc] sm:$0xff]
        %v1299 = vld [vmem:[#allocation2 + $0x1c4] sm:$0xf]
        %v1300 = vld [vmem:[#allocation2 + $0x1c8] sm:$0xff]
        %v1301 = vld [vmem:[#allocation2 + $0x1d0] sm:$0xf]
        %v1302 = vld [vmem:[#allocation2 + $0x1d4] sm:$0xff]
        %v1303 = vld [vmem:[#allocation2 + $0x1dc] sm:$0xf]
        %v1304 = vld [vmem:[#allocation2 + $0x1e0] sm:$0xff]
        %v1305 = vld [vmem:[#allocation2 + $0x1e8] sm:$0xf]
        %v1306 = vld [vmem:[#allocation2 + $0x1ec] sm:$0xff]
        %v1307 = vld [vmem:[#allocation2 + $0x1f4] sm:$0xf]
        %v1308 = vld [vmem:[#allocation2 + $0x1f8] sm:$0xff]
        %v1309 = vld [vmem:[#allocation2 + $0x200] sm:$0xf]
        %v1310 = vld [vmem:[#allocation2 + $0x204] sm:$0xff]
        %v1311 = vld [vmem:[#allocation2 + $0x20c] sm:$0xf]
        %v1312 = vld [vmem:[#allocation2 + $0x210] sm:$0xff]
        %v1313 = vld [vmem:[#allocation2 + $0x218] sm:$0xf]
        %v1314 = vld [vmem:[#allocation2 + $0x21c] sm:$0xff]
        %v1315 = vld [vmem:[#allocation2 + $0x224] sm:$0xf]
        %v1316 = vld [vmem:[#allocation2 + $0x228] sm:$0xff]
        %v1317 = vld [vmem:[#allocation2 + $0x230] sm:$0xf]
        %v1318 = vld [vmem:[#allocation2 + $0x234] sm:$0xff]
        %v1319 = vld [vmem:[#allocation2 + $0x23c] sm:$0xf]
        %v1416 = vunpack.c.l.b16 %v1224
        %v1417 = vunpack.c.h.b16 %v1224
        %v1418 = vunpack.c.l.b16 %v1225
        %v1419 = vunpack.c.l.b16 %v1226
        %v1420 = vunpack.c.h.b16 %v1226
        %v1421 = vunpack.c.l.b16 %v1227
        %v1422 = vunpack.c.l.b16 %v1228
        %v1423 = vunpack.c.h.b16 %v1228
        %v1424 = vunpack.c.l.b16 %v1229
        %v1425 = vunpack.c.l.b16 %v1230
        %v1426 = vunpack.c.h.b16 %v1230
        %v1427 = vunpack.c.l.b16 %v1231
        %v1428 = vunpack.c.l.b16 %v1232
        %v1429 = vunpack.c.h.b16 %v1232
        %v1430 = vunpack.c.l.b16 %v1233
        %v1431 = vunpack.c.l.b16 %v1234
        %v1432 = vunpack.c.h.b16 %v1234
        %v1433 = vunpack.c.l.b16 %v1235
        %v1434 = vunpack.c.l.b16 %v1236
        %v1435 = vunpack.c.h.b16 %v1236
        %v1436 = vunpack.c.l.b16 %v1237
        %v1437 = vunpack.c.l.b16 %v1238
        %v1438 = vunpack.c.h.b16 %v1238
        %v1439 = vunpack.c.l.b16 %v1239
        %v1440 = vunpack.c.l.b16 %v1240
        %v1441 = vunpack.c.h.b16 %v1240
        %v1442 = vunpack.c.l.b16 %v1241
        %v1443 = vunpack.c.l.b16 %v1242
        %v1444 = vunpack.c.h.b16 %v1242
        %v1445 = vunpack.c.l.b16 %v1243
        %v1446 = vunpack.c.l.b16 %v1244
        %v1447 = vunpack.c.h.b16 %v1244
        %v1448 = vunpack.c.l.b16 %v1245
        %v1449 = vunpack.c.l.b16 %v1246
        %v1450 = vunpack.c.h.b16 %v1246
        %v1451 = vunpack.c.l.b16 %v1247
        %v1452 = vunpack.c.l.b16 %v1248
        %v1453 = vunpack.c.h.b16 %v1248
        %v1454 = vunpack.c.l.b16 %v1249
        %v1455 = vunpack.c.l.b16 %v1250
        %v1456 = vunpack.c.h.b16 %v1250
        %v1457 = vunpack.c.l.b16 %v1251
        %v1458 = vunpack.c.l.b16 %v1252
        %v1459 = vunpack.c.h.b16 %v1252
        %v1460 = vunpack.c.l.b16 %v1253
        %v1461 = vunpack.c.l.b16 %v1254
        %v1462 = vunpack.c.h.b16 %v1254
        %v1463 = vunpack.c.l.b16 %v1255
        %v1464 = vunpack.c.l.b16 %v1256
        %v1465 = vunpack.c.h.b16 %v1256
        %v1466 = vunpack.c.l.b16 %v1257
        %v1467 = vunpack.c.l.b16 %v1258
        %v1468 = vunpack.c.h.b16 %v1258
        %v1469 = vunpack.c.l.b16 %v1259
        %v1470 = vunpack.c.l.b16 %v1260
        %v1471 = vunpack.c.h.b16 %v1260
        %v1472 = vunpack.c.l.b16 %v1261
        %v1473 = vunpack.c.l.b16 %v1262
        %v1474 = vunpack.c.h.b16 %v1262
        %v1475 = vunpack.c.l.b16 %v1263
        %v1476 = vunpack.c.l.b16 %v1264
        %v1477 = vunpack.c.h.b16 %v1264
        %v1478 = vunpack.c.l.b16 %v1265
        %v1479 = vunpack.c.l.b16 %v1266
        %v1480 = vunpack.c.h.b16 %v1266
        %v1481 = vunpack.c.l.b16 %v1267
        %v1482 = vunpack.c.l.b16 %v1268
        %v1483 = vunpack.c.h.b16 %v1268
        %v1484 = vunpack.c.l.b16 %v1269
        %v1485 = vunpack.c.l.b16 %v1270
        %v1486 = vunpack.c.h.b16 %v1270
        %v1487 = vunpack.c.l.b16 %v1271
        %v1488 = vunpack.c.l.b16 %v1272
        %v1489 = vunpack.c.h.b16 %v1272
        %v1490 = vunpack.c.l.b16 %v1273
        %v1491 = vunpack.c.l.b16 %v1274
        %v1492 = vunpack.c.h.b16 %v1274
        %v1493 = vunpack.c.l.b16 %v1275
        %v1494 = vunpack.c.l.b16 %v1276
        %v1495 = vunpack.c.h.b16 %v1276
        %v1496 = vunpack.c.l.b16 %v1277
        %v1497 = vunpack.c.l.b16 %v1278
        %v1498 = vunpack.c.h.b16 %v1278
        %v1499 = vunpack.c.l.b16 %v1279
        %v1500 = vunpack.c.l.b16 %v1280
        %v1501 = vunpack.c.h.b16 %v1280
        %v1502 = vunpack.c.l.b16 %v1281
        %v1503 = vunpack.c.l.b16 %v1282
        %v1504 = vunpack.c.h.b16 %v1282
        %v1505 = vunpack.c.l.b16 %v1283
        %v1506 = vunpack.c.l.b16 %v1284
        %v1507 = vunpack.c.h.b16 %v1284
        %v1508 = vunpack.c.l.b16 %v1285
        %v1509 = vunpack.c.l.b16 %v1286
        %v1510 = vunpack.c.h.b16 %v1286
        %v1511 = vunpack.c.l.b16 %v1287
        %v1512 = vunpack.c.l.b16 %v1288
        %v1513 = vunpack.c.h.b16 %v1288
        %v1514 = vunpack.c.l.b16 %v1289
        %v1515 = vunpack.c.l.b16 %v1290
        %v1516 = vunpack.c.h.b16 %v1290
        %v1517 = vunpack.c.l.b16 %v1291
        %v1518 = vunpack.c.l.b16 %v1292
        %v1519 = vunpack.c.h.b16 %v1292
        %v1520 = vunpack.c.l.b16 %v1293
        %v1521 = vunpack.c.l.b16 %v1294
        %v1522 = vunpack.c.h.b16 %v1294
        %v1523 = vunpack.c.l.b16 %v1295
        %v1524 = vunpack.c.l.b16 %v1296
        %v1525 = vunpack.c.h.b16 %v1296
        %v1526 = vunpack.c.l.b16 %v1297
        %v1527 = vunpack.c.l.b16 %v1298
        %v1528 = vunpack.c.h.b16 %v1298
        %v1529 = vunpack.c.l.b16 %v1299
        %v1530 = vunpack.c.l.b16 %v1300
        %v1531 = vunpack.c.h.b16 %v1300
        %v1532 = vunpack.c.l.b16 %v1301
        %v1533 = vunpack.c.l.b16 %v1302
        %v1534 = vunpack.c.h.b16 %v1302
        %v1535 = vunpack.c.l.b16 %v1303
        %v1536 = vunpack.c.l.b16 %v1304
        %v1537 = vunpack.c.h.b16 %v1304
        %v1538 = vunpack.c.l.b16 %v1305
        %v1539 = vunpack.c.l.b16 %v1306
        %v1540 = vunpack.c.h.b16 %v1306
        %v1541 = vunpack.c.l.b16 %v1307
        %v1542 = vunpack.c.l.b16 %v1308
        %v1543 = vunpack.c.h.b16 %v1308
        %v1544 = vunpack.c.l.b16 %v1309
        %v1545 = vunpack.c.l.b16 %v1310
        %v1546 = vunpack.c.h.b16 %v1310
        %v1547 = vunpack.c.l.b16 %v1311
        %v1548 = vunpack.c.l.b16 %v1312
        %v1549 = vunpack.c.h.b16 %v1312
        %v1550 = vunpack.c.l.b16 %v1313
        %v1551 = vunpack.c.l.b16 %v1314
        %v1552 = vunpack.c.h.b16 %v1314
        %v1553 = vunpack.c.l.b16 %v1315
        %v1554 = vunpack.c.l.b16 %v1316
        %v1555 = vunpack.c.h.b16 %v1316
        %v1556 = vunpack.c.l.b16 %v1317
        %v1557 = vunpack.c.l.b16 %v1318
        %v1558 = vunpack.c.h.b16 %v1318
        %v1559 = vunpack.c.l.b16 %v1319
        %v1560 = vpack.c.b16 %v1419, %v1416
        %v1561 = vpack.c.b16 %v1420, %v1417
        %v1562 = vpack.c.b16 %v1421, %v1418
        %v1563 = vpack.c.b16 %v1425, %v1422
        %v1564 = vpack.c.b16 %v1426, %v1423
        %v1565 = vpack.c.b16 %v1427, %v1424
        %v1566 = vpack.c.b16 %v1431, %v1428
        %v1567 = vpack.c.b16 %v1432, %v1429
        %v1568 = vpack.c.b16 %v1433, %v1430
        %v1569 = vpack.c.b16 %v1437, %v1434
        %v1570 = vpack.c.b16 %v1438, %v1435
        %v1571 = vpack.c.b16 %v1439, %v1436
        %v1572 = vpack.c.b16 %v1443, %v1440
        %v1573 = vpack.c.b16 %v1444, %v1441
        %v1574 = vpack.c.b16 %v1445, %v1442
        %v1575 = vpack.c.b16 %v1449, %v1446
        %v1576 = vpack.c.b16 %v1450, %v1447
        %v1577 = vpack.c.b16 %v1451, %v1448
        %v1578 = vpack.c.b16 %v1455, %v1452
        %v1579 = vpack.c.b16 %v1456, %v1453
        %v1580 = vpack.c.b16 %v1457, %v1454
        %v1581 = vpack.c.b16 %v1461, %v1458
        %v1582 = vpack.c.b16 %v1462, %v1459
        %v1583 = vpack.c.b16 %v1463, %v1460
        %v1584 = vpack.c.b16 %v1467, %v1464
        %v1585 = vpack.c.b16 %v1468, %v1465
        %v1586 = vpack.c.b16 %v1469, %v1466
        %v1587 = vpack.c.b16 %v1473, %v1470
        %v1588 = vpack.c.b16 %v1474, %v1471
        %v1589 = vpack.c.b16 %v1475, %v1472
        %v1590 = vpack.c.b16 %v1479, %v1476
        %v1591 = vpack.c.b16 %v1480, %v1477
        %v1592 = vpack.c.b16 %v1481, %v1478
        %v1593 = vpack.c.b16 %v1485, %v1482
        %v1594 = vpack.c.b16 %v1486, %v1483
        %v1595 = vpack.c.b16 %v1487, %v1484
        %v1596 = vpack.c.b16 %v1491, %v1488
        %v1597 = vpack.c.b16 %v1492, %v1489
        %v1598 = vpack.c.b16 %v1493, %v1490
        %v1599 = vpack.c.b16 %v1497, %v1494
        %v1600 = vpack.c.b16 %v1498, %v1495
        %v1601 = vpack.c.b16 %v1499, %v1496
        %v1602 = vpack.c.b16 %v1503, %v1500
        %v1603 = vpack.c.b16 %v1504, %v1501
        %v1604 = vpack.c.b16 %v1505, %v1502
        %v1605 = vpack.c.b16 %v1509, %v1506
        %v1606 = vpack.c.b16 %v1510, %v1507
        %v1607 = vpack.c.b16 %v1511, %v1508
        %v1608 = vpack.c.b16 %v1515, %v1512
        %v1609 = vpack.c.b16 %v1516, %v1513
        %v1610 = vpack.c.b16 %v1517, %v1514
        %v1611 = vpack.c.b16 %v1521, %v1518
        %v1612 = vpack.c.b16 %v1522, %v1519
        %v1613 = vpack.c.b16 %v1523, %v1520
        %v1614 = vpack.c.b16 %v1527, %v1524
        %v1615 = vpack.c.b16 %v1528, %v1525
        %v1616 = vpack.c.b16 %v1529, %v1526
        %v1617 = vpack.c.b16 %v1533, %v1530
        %v1618 = vpack.c.b16 %v1534, %v1531
        %v1619 = vpack.c.b16 %v1535, %v1532
        %v1620 = vpack.c.b16 %v1539, %v1536
        %v1621 = vpack.c.b16 %v1540, %v1537
        %v1622 = vpack.c.b16 %v1541, %v1538
        %v1623 = vpack.c.b16 %v1545, %v1542
        %v1624 = vpack.c.b16 %v1546, %v1543
        %v1625 = vpack.c.b16 %v1547, %v1544
        %v1626 = vpack.c.b16 %v1551, %v1548
        %v1627 = vpack.c.b16 %v1552, %v1549
        %v1628 = vpack.c.b16 %v1553, %v1550
        %v1629 = vpack.c.b16 %v1557, %v1554
        %v1630 = vpack.c.b16 %v1558, %v1555
        %v1631 = vpack.c.b16 %v1559, %v1556
        %1704 = vmatpush.bf16.msra.mxu0 %v1581
        %1705 = vmatpush.bf16.msra.mxu0 %v1578
        %1706 = vmatpush.bf16.msra.mxu0 %v1575
        %1707 = vmatpush.bf16.msra.mxu0 %v1572
        %1708 = vmatpush.bf16.msra.mxu0 %v1569
        %1709 = vmatpush.bf16.msra.mxu0 %v1566
        %1710 = vmatpush.bf16.msra.mxu0 %v1563
        %1711 = vmatpush.bf16.msra.mxu0 %v1560
        %1712 = vmatmul.bf16.gmra.mxu0 %v570
        %v1713 = vpop.f32.mrf.mxu0
        %v1714 = vadd.f32 0.0, %v1713
        %v1715 = vpop.f32.mrf.mxu0
        %v1716 = vadd.f32 0.0, %v1715
        %1717 = vmatmul.bf16.gmra.mxu0 %v571
        %v1718 = vpop.f32.mrf.mxu0
        %v1719 = vadd.f32 0.0, %v1718
        %v1720 = vpop.f32.mrf.mxu0
        %1721 = vdwg.mxu0
        %1722 = vmatpush.bf16.msra.mxu0 %v1605
        %1723 = vmatpush.bf16.msra.mxu0 %v1602
        %1724 = vmatpush.bf16.msra.mxu0 %v1599
        %1725 = vmatpush.bf16.msra.mxu0 %v1596
        %1726 = vmatpush.bf16.msra.mxu0 %v1593
        %1727 = vmatpush.bf16.msra.mxu0 %v1590
        %1728 = vmatpush.bf16.msra.mxu0 %v1587
        %1729 = vmatpush.bf16.msra.mxu0 %v1584
        %1730 = vmatmul.bf16.gmra.mxu0 %v429
        %v1731 = vpop.f32.mrf.mxu0
        %v1732 = vadd.f32 %v1714, %v1731
        %v1733 = vpop.f32.mrf.mxu0
        %v1734 = vadd.f32 %v1716, %v1733
        %1735 = vmatmul.bf16.gmra.mxu0 %v430
        %v1736 = vpop.f32.mrf.mxu0
        %v1737 = vadd.f32 %v1719, %v1736
        %v1738 = vpop.f32.mrf.mxu0
        %1739 = vdwg.mxu0
        %1740 = vmatpush.bf16.msra.mxu0 %v1629
        %1741 = vmatpush.bf16.msra.mxu0 %v1626
        %1742 = vmatpush.bf16.msra.mxu0 %v1623
        %1743 = vmatpush.bf16.msra.mxu0 %v1620
        %1744 = vmatpush.bf16.msra.mxu0 %v1617
        %1745 = vmatpush.bf16.msra.mxu0 %v1614
        %1746 = vmatpush.bf16.msra.mxu0 %v1611
        %1747 = vmatpush.bf16.msra.mxu0 %v1608
        %1748 = vmatmul.bf16.gmra.mxu0 %v578
        %v1749 = vpop.f32.mrf.mxu0
        %v1750 = vadd.f32 %v1732, %v1749
        %v1751 = vpop.f32.mrf.mxu0
        %v1752 = vadd.f32 %v1734, %v1751
        %1753 = vmatmul.bf16.gmra.mxu0 %v579
        %v1754 = vpop.f32.mrf.mxu0
        %v1755 = vadd.f32 %v1737, %v1754
        %v1756 = vpop.f32.mrf.mxu0
        %1757 = vdwg.mxu0
        %1758 = vmatpush.bf16.msra.mxu0 %v1582
        %1759 = vmatpush.bf16.msra.mxu0 %v1579
        %1760 = vmatpush.bf16.msra.mxu0 %v1576
        %1761 = vmatpush.bf16.msra.mxu0 %v1573
        %1762 = vmatpush.bf16.msra.mxu0 %v1570
        %1763 = vmatpush.bf16.msra.mxu0 %v1567
        %1764 = vmatpush.bf16.msra.mxu0 %v1564
        %1765 = vmatpush.bf16.msra.mxu0 %v1561
        %1766 = vmatmul.bf16.gmra.mxu0 %v570
        %v1767 = vpop.f32.mrf.mxu0
        %v1768 = vadd.f32 0.0, %v1767
        %v1769 = vpop.f32.mrf.mxu0
        %v1770 = vadd.f32 0.0, %v1769
        %1771 = vmatmul.bf16.gmra.mxu0 %v571
        %v1772 = vpop.f32.mrf.mxu0
        %v1773 = vadd.f32 0.0, %v1772
        %v1774 = vpop.f32.mrf.mxu0
        %1775 = vdwg.mxu0
        %1776 = vmatpush.bf16.msra.mxu0 %v1606
        %1777 = vmatpush.bf16.msra.mxu0 %v1603
        %1778 = vmatpush.bf16.msra.mxu0 %v1600
        %1779 = vmatpush.bf16.msra.mxu0 %v1597
        %1780 = vmatpush.bf16.msra.mxu0 %v1594
        %1781 = vmatpush.bf16.msra.mxu0 %v1591
        %1782 = vmatpush.bf16.msra.mxu0 %v1588
        %1783 = vmatpush.bf16.msra.mxu0 %v1585
        %1784 = vmatmul.bf16.gmra.mxu0 %v429
        %v1785 = vpop.f32.mrf.mxu0
        %v1786 = vadd.f32 %v1768, %v1785
        %v1787 = vpop.f32.mrf.mxu0
        %v1788 = vadd.f32 %v1770, %v1787
        %1789 = vmatmul.bf16.gmra.mxu0 %v430
        %v1790 = vpop.f32.mrf.mxu0
        %v1791 = vadd.f32 %v1773, %v1790
        %v1792 = vpop.f32.mrf.mxu0
        %1793 = vdwg.mxu0
        %1794 = vmatpush.bf16.msra.mxu0 %v1630
        %1795 = vmatpush.bf16.msra.mxu0 %v1627
        %1796 = vmatpush.bf16.msra.mxu0 %v1624
        %1797 = vmatpush.bf16.msra.mxu0 %v1621
        %1798 = vmatpush.bf16.msra.mxu0 %v1618
        %1799 = vmatpush.bf16.msra.mxu0 %v1615
        %1800 = vmatpush.bf16.msra.mxu0 %v1612
        %1801 = vmatpush.bf16.msra.mxu0 %v1609
        %1802 = vmatmul.bf16.gmra.mxu0 %v578
        %v1803 = vpop.f32.mrf.mxu0
        %v1804 = vadd.f32 %v1786, %v1803
        %v1805 = vpop.f32.mrf.mxu0
        %v1806 = vadd.f32 %v1788, %v1805
        %1807 = vmatmul.bf16.gmra.mxu0 %v579
        %v1808 = vpop.f32.mrf.mxu0
        %v1809 = vadd.f32 %v1791, %v1808
        %v1810 = vpop.f32.mrf.mxu0
        %1811 = vdwg.mxu0
        %1812 = vmatpush.bf16.msra.mxu0 %v1583
        %1813 = vmatpush.bf16.msra.mxu0 %v1580
        %1814 = vmatpush.bf16.msra.mxu0 %v1577
        %1815 = vmatpush.bf16.msra.mxu0 %v1574
        %1816 = vmatpush.bf16.msra.mxu0 %v1571
        %1817 = vmatpush.bf16.msra.mxu0 %v1568
        %1818 = vmatpush.bf16.msra.mxu0 %v1565
        %1819 = vmatpush.bf16.msra.mxu0 %v1562
        %1820 = vmatmul.bf16.gmra.mxu0 %v570
        %v1821 = vpop.f32.mrf.mxu0
        %v1822 = vadd.f32 0.0, %v1821
        %v1823 = vpop.f32.mrf.mxu0
        %v1824 = vadd.f32 0.0, %v1823
        %1825 = vmatmul.bf16.gmra.mxu0 %v571
        %v1826 = vpop.f32.mrf.mxu0
        %v1827 = vadd.f32 0.0, %v1826
        %v1828 = vpop.f32.mrf.mxu0
        %1829 = vdwg.mxu0
        %1830 = vmatpush.bf16.msra.mxu0 %v1607
        %1831 = vmatpush.bf16.msra.mxu0 %v1604
        %1832 = vmatpush.bf16.msra.mxu0 %v1601
        %1833 = vmatpush.bf16.msra.mxu0 %v1598
        %1834 = vmatpush.bf16.msra.mxu0 %v1595
        %1835 = vmatpush.bf16.msra.mxu0 %v1592
        %1836 = vmatpush.bf16.msra.mxu0 %v1589
        %1837 = vmatpush.bf16.msra.mxu0 %v1586
        %1838 = vmatmul.bf16.gmra.mxu0 %v429
        %v1839 = vpop.f32.mrf.mxu0
        %v1840 = vadd.f32 %v1822, %v1839
        %v1841 = vpop.f32.mrf.mxu0
        %v1842 = vadd.f32 %v1824, %v1841
        %1843 = vmatmul.bf16.gmra.mxu0 %v430
        %v1844 = vpop.f32.mrf.mxu0
        %v1845 = vadd.f32 %v1827, %v1844
        %v1846 = vpop.f32.mrf.mxu0
        %1847 = vdwg.mxu0
        %1848 = vmatpush.bf16.msra.mxu0 %v1631
        %1849 = vmatpush.bf16.msra.mxu0 %v1628
        %1850 = vmatpush.bf16.msra.mxu0 %v1625
        %1851 = vmatpush.bf16.msra.mxu0 %v1622
        %1852 = vmatpush.bf16.msra.mxu0 %v1619
        %1853 = vmatpush.bf16.msra.mxu0 %v1616
        %1854 = vmatpush.bf16.msra.mxu0 %v1613
        %1855 = vmatpush.bf16.msra.mxu0 %v1610
        %1856 = vmatmul.bf16.gmra.mxu0 %v578
        %v1857 = vpop.f32.mrf.mxu0
        %v1858 = vadd.f32 %v1840, %v1857
        %v1859 = vpop.f32.mrf.mxu0
        %v1860 = vadd.f32 %v1842, %v1859
        %1861 = vmatmul.bf16.gmra.mxu0 %v579
        %v1862 = vpop.f32.mrf.mxu0
        %v1863 = vadd.f32 %v1845, %v1862
        %v1864 = vpop.f32.mrf.mxu0
        %1865 = vdwg.mxu0
        %v1866 = vld [vmem:[%s7] sm:$0x1]
        %v1867 = vperm.slane %v1866, 0
        %v1868 = vadd.f32 %v1108, %v1867
        %v1869 = vadd.f32 %v1110, %v1867
        %v1870 = vadd.f32 %v1113, %v1867
        %v1871 = vld [vmem:[%s7 + $0x1] sm:$0x1]
        %v1872 = vperm.slane %v1871, 0
        %v1873 = vadd.f32 %v1750, %v1872
        %v1874 = vadd.f32 %v1752, %v1872
        %v1875 = vadd.f32 %v1755, %v1872
        %v1876 = vmul.f32 %v1868, %v1873
        %v1877 = vmul.f32 %v1869, %v1874
        %v1878 = vmul.f32 %v1870, %v1875
        %v1879 = vxor.u32 %v1876, 2147483648
        %v1880 = vxor.u32 %v1877, 2147483648
        %v1881 = vxor.u32 %v1878, 2147483648
        %v1882 = vmul.f32 %v1879, 1.442695
        %v1883 = vpow.pop %v1882
        %v1884 = vmul.f32 %v1880, 1.442695
        %v1885 = vpow.pop %v1884
        %v1886 = vmul.f32 %v1881, 1.442695
        %v1887 = vpow.pop %v1886
        %v1888 = vadd.f32 %v1883, 1.0
        %v1889 = vadd.f32 %v1885, 1.0
        %v1890 = vadd.f32 %v1887, 1.0
        %v1891 = vrcp.pop %v1888
        %v1892 = vmul.f32 %v1888, %v1891
        %v1893 = vsub.f32 1.0, %v1892
        %v1894 = vmul.f32 %v1891, %v1893
        %v1895 = vadd.f32 %v1891, %v1894
        %vm1896 = vweird.f32 %v1888
        %vm1897 = vweird.f32 %v1891
        %vm1898 = vmor %vm1896, %vm1897
        %v1899 = vsel %vm1898, %v1891, %v1895
        %v1900 = vand.u32 2147483647, %v1888
        %vm1901 = vcmp.eq.f32.partialorder %v1900, 8.507059e+37
        %v1902 = vand.u32 %v1888, 2147483648
        %v1903 = vor.u32 1.1754944e-38, %v1902
        %v1904 = vsel %vm1901, %v1903, %v1899
        %v1905 = vmul.f32 1.0, %v1904
        %v1906 = vrcp.pop %v1889
        %v1907 = vmul.f32 %v1889, %v1906
        %v1908 = vsub.f32 1.0, %v1907
        %v1909 = vmul.f32 %v1906, %v1908
        %v1910 = vadd.f32 %v1906, %v1909
        %vm1911 = vweird.f32 %v1889
        %vm1912 = vweird.f32 %v1906
        %vm1913 = vmor %vm1911, %vm1912
        %v1914 = vsel %vm1913, %v1906, %v1910
        %v1915 = vand.u32 2147483647, %v1889
        %vm1916 = vcmp.eq.f32.partialorder %v1915, 8.507059e+37
        %v1917 = vand.u32 %v1889, 2147483648
        %v1918 = vor.u32 1.1754944e-38, %v1917
        %v1919 = vsel %vm1916, %v1918, %v1914
        %v1920 = vmul.f32 1.0, %v1919
        %v1921 = vrcp.pop %v1890
        %v1922 = vmul.f32 %v1890, %v1921
        %v1923 = vsub.f32 1.0, %v1922
        %v1924 = vmul.f32 %v1921, %v1923
        %v1925 = vadd.f32 %v1921, %v1924
        %vm1926 = vweird.f32 %v1890
        %vm1927 = vweird.f32 %v1921
        %vm1928 = vmor %vm1926, %vm1927
        %v1929 = vsel %vm1928, %v1921, %v1925
        %v1930 = vand.u32 2147483647, %v1890
        %vm1931 = vcmp.eq.f32.partialorder %v1930, 8.507059e+37
        %v1932 = vand.u32 %v1890, 2147483648
        %v1933 = vor.u32 1.1754944e-38, %v1932
        %v1934 = vsel %vm1931, %v1933, %v1929
        %v1935 = vmul.f32 1.0, %v1934
        %v1936 = vunpack.c.l.bf16 %v401
        %v1937 = vunpack.c.l.bf16 %v402
        %v1938 = vunpack.c.l.bf16 %v403
        %v1939 = vunpack.c.l.bf16 %v404
        %v1940 = vunpack.c.l.bf16 %v405
        %v1941 = vunpack.c.l.bf16 %v406
        %v1942 = vmul.f32 %v1936, %v1905
        %v1943 = vmul.f32 %v1937, %v1920
        %v1944 = vmul.f32 %v1938, %v1935
        %v1945 = vmul.f32 %v1939, %v1905
        %v1946 = vmul.f32 %v1940, %v1920
        %v1947 = vmul.f32 %v1941, %v1935
        %v1948 = vpack.c.bf16 %v1942, %v1942
        %v1949 = vpack.c.bf16 %v1943, %v1943
        %v1950 = vpack.c.bf16 %v1944, %v1944
        %v1951 = vpack.c.bf16 %v1945, %v1945
        %v1952 = vpack.c.bf16 %v1946, %v1946
        %v1953 = vpack.c.bf16 %v1947, %v1947
        %v1957 = vunpack.c.l.b16 %v1948
        %v1958 = vunpack.c.l.b16 %v1949
        %v1959 = vunpack.c.l.b16 %v1950
        %v1960 = vpack.c.b16 %v1958, %v1957
        %v1961 = vpack.c.b16 %v1959, %v1959
        %v1966 = vunpack.c.l.b16 %v1951
        %v1967 = vunpack.c.l.b16 %v1952
        %v1968 = vunpack.c.l.b16 %v1953
        %v1969 = vpack.c.b16 %v1967, %v1966
        %v1970 = vpack.c.b16 %v1968, %v1968
        %v1973 = vsel %vm447, %v1961, 0
        %v1976 = vsel %vm447, %v1970, 0
        %1978 = vmatpush.bf16.msra.mxu0 0
        %1979 = vmatpush.bf16.msra.mxu0 0
        %1980 = vmatpush.bf16.msra.mxu0 0
        %1981 = vmatpush.bf16.msra.mxu0 0
        %1982 = vmatpush.bf16.msra.mxu0 0
        %1983 = vmatpush.bf16.msra.mxu0 0
        %1984 = vmatpush.bf16.msra.mxu0 %v1973
        %1985 = vmatpush.bf16.msra.mxu0 %v1960
        %1986 = vmatmul.bf16.gmra.mxu0 %v442
        %v1987 = vpop.f32.mrf.mxu0
        %v1988 = vadd.f32 0.0, %v1987
        %v1989 = vpop.f32.mrf.mxu0
        %v1990 = vadd.f32 0.0, %v1989
        %1991 = vmatmul.bf16.gmra.mxu0 %v445
        %v1992 = vpop.f32.mrf.mxu0
        %v1993 = vadd.f32 0.0, %v1992
        %v1994 = vpop.f32.mrf.mxu0
        %1995 = vdwg.mxu0
        %1996 = vmatpush.bf16.msra.mxu0 0
        %1997 = vmatpush.bf16.msra.mxu0 0
        %1998 = vmatpush.bf16.msra.mxu0 0
        %1999 = vmatpush.bf16.msra.mxu0 0
        %2000 = vmatpush.bf16.msra.mxu0 0
        %2001 = vmatpush.bf16.msra.mxu0 0
        %2002 = vmatpush.bf16.msra.mxu0 %v1976
        %2003 = vmatpush.bf16.msra.mxu0 %v1969
        %2004 = vmatmul.bf16.gmra.mxu0 %v442
        %v2005 = vpop.f32.mrf.mxu0
        %v2006 = vadd.f32 0.0, %v2005
        %v2007 = vpop.f32.mrf.mxu0
        %v2008 = vadd.f32 0.0, %v2007
        %2009 = vmatmul.bf16.gmra.mxu0 %v445
        %v2010 = vpop.f32.mrf.mxu0
        %v2011 = vadd.f32 0.0, %v2010
        %v2012 = vpop.f32.mrf.mxu0
        %2013 = vdwg.mxu0
        %v2014 = vpack.c.bf16 %v2006, %v1988
        %v2015 = vpack.c.bf16 %v2008, %v1990
        %v2016 = vpack.c.bf16 %v2011, %v1993
        %2017 = vmatpush.bf16.msra.mxu0 0
        %2018 = vmatpush.bf16.msra.mxu0 0
        %2019 = vmatpush.bf16.msra.mxu0 0
        %2020 = vmatpush.bf16.msra.mxu0 0
        %2021 = vmatpush.bf16.msra.mxu0 0
        %2022 = vmatpush.bf16.msra.mxu0 0
        %2023 = vmatpush.bf16.msra.mxu0 %v1973
        %2024 = vmatpush.bf16.msra.mxu0 %v1960
        %2025 = vmatmul.bf16.gmra.mxu0 %v502
        %v2026 = vpop.f32.mrf.mxu0
        %v2027 = vadd.f32 0.0, %v2026
        %v2028 = vpop.f32.mrf.mxu0
        %v2029 = vadd.f32 0.0, %v2028
        %2030 = vmatmul.bf16.gmra.mxu0 %v505
        %v2031 = vpop.f32.mrf.mxu0
        %v2032 = vadd.f32 0.0, %v2031
        %v2033 = vpop.f32.mrf.mxu0
        %2034 = vdwg.mxu0
        %2035 = vmatpush.bf16.msra.mxu0 0
        %2036 = vmatpush.bf16.msra.mxu0 0
        %2037 = vmatpush.bf16.msra.mxu0 0
        %2038 = vmatpush.bf16.msra.mxu0 0
        %2039 = vmatpush.bf16.msra.mxu0 0
        %2040 = vmatpush.bf16.msra.mxu0 0
        %2041 = vmatpush.bf16.msra.mxu0 %v1976
        %2042 = vmatpush.bf16.msra.mxu0 %v1969
        %2043 = vmatmul.bf16.gmra.mxu0 %v502
        %v2044 = vpop.f32.mrf.mxu0
        %v2045 = vadd.f32 0.0, %v2044
        %v2046 = vpop.f32.mrf.mxu0
        %v2047 = vadd.f32 0.0, %v2046
        %2048 = vmatmul.bf16.gmra.mxu0 %v505
        %v2049 = vpop.f32.mrf.mxu0
        %v2050 = vadd.f32 0.0, %v2049
        %v2051 = vpop.f32.mrf.mxu0
        %2052 = vdwg.mxu0
        %v2053 = vpack.c.bf16 %v2045, %v2027
        %v2054 = vpack.c.bf16 %v2047, %v2029
        %v2055 = vpack.c.bf16 %v2050, %v2032
        %v2059 = vunpack.c.l.b16 %v2014
        %v2060 = vunpack.c.l.b16 %v2015
        %v2061 = vunpack.c.l.b16 %v2016
        %v2062 = vpack.c.b16 %v2060, %v2059
        %v2063 = vpack.c.b16 %v2061, %v2061
        %v2070 = vunpack.c.l.b16 %v2053
        %v2071 = vunpack.c.l.b16 %v2054
        %v2072 = vunpack.c.l.b16 %v2055
        %v2073 = vpack.c.b16 %v2071, %v2070
        %v2074 = vpack.c.b16 %v2072, %v2072
        %v2077 = vunpack.c.h.b16 %v2014
        %v2078 = vunpack.c.h.b16 %v2015
        %v2079 = vunpack.c.h.b16 %v2016
        %v2080 = vpack.c.b16 %v2078, %v2077
        %v2081 = vpack.c.b16 %v2079, %v2079
        %v2085 = vunpack.c.h.b16 %v2053
        %v2086 = vunpack.c.h.b16 %v2054
        %v2087 = vunpack.c.h.b16 %v2055
        %v2088 = vpack.c.b16 %v2086, %v2085
        %v2089 = vpack.c.b16 %v2087, %v2087
        %v2092 = vld [vmem:[%s5] sm:$0xff]
        %v2093 = vld [vmem:[%s5 + $0x8] sm:$0xff]
        %v2094 = vld [vmem:[%s5 + $0x10] sm:$0xff]
        %v2095 = vld [vmem:[%s5 + $0x18] sm:$0xff]
        %v2096 = vld [vmem:[%s5 + $0x20] sm:$0xff]
        %v2097 = vld [vmem:[%s5 + $0x28] sm:$0xff]
        %v2098 = vld [vmem:[%s5 + $0x30] sm:$0xff]
        %v2099 = vld [vmem:[%s5 + $0x38] sm:$0xff]
        %v2100 = vld [vmem:[%s5 + $0x40] sm:$0xff]
        %v2101 = vld [vmem:[%s5 + $0x48] sm:$0xff]
        %v2102 = vld [vmem:[%s5 + $0x50] sm:$0xff]
        %v2103 = vld [vmem:[%s5 + $0x58] sm:$0xff]
        %v2104 = vld [vmem:[%s5 + $0x60] sm:$0xff]
        %v2105 = vld [vmem:[%s5 + $0x68] sm:$0xff]
        %v2106 = vld [vmem:[%s5 + $0x70] sm:$0xff]
        %v2107 = vld [vmem:[%s5 + $0x78] sm:$0xff]
        %v2108 = vld [vmem:[%s5 + $0x80] sm:$0xff]
        %v2109 = vld [vmem:[%s5 + $0x88] sm:$0xff]
        %v2110 = vld [vmem:[%s5 + $0x90] sm:$0xff]
        %v2111 = vld [vmem:[%s5 + $0x98] sm:$0xff]
        %v2112 = vld [vmem:[%s5 + $0xa0] sm:$0xff]
        %v2113 = vld [vmem:[%s5 + $0xa8] sm:$0xff]
        %v2114 = vld [vmem:[%s5 + $0xb0] sm:$0xff]
        %v2115 = vld [vmem:[%s5 + $0xb8] sm:$0xff]
        %v2116 = vld [vmem:[%s5 + $0xc0] sm:$0xff]
        %v2117 = vld [vmem:[%s5 + $0xc8] sm:$0xff]
        %v2118 = vld [vmem:[%s5 + $0xd0] sm:$0xff]
        %v2119 = vld [vmem:[%s5 + $0xd8] sm:$0xff]
        %v2120 = vld [vmem:[%s5 + $0xe0] sm:$0xff]
        %v2121 = vld [vmem:[%s5 + $0xe8] sm:$0xff]
        %v2122 = vld [vmem:[%s5 + $0xf0] sm:$0xff]
        %v2123 = vld [vmem:[%s5 + $0xf8] sm:$0xff]
        %v2124 = vld [vmem:[%s5 + $0x100] sm:$0xff]
        %v2125 = vld [vmem:[%s5 + $0x108] sm:$0xff]
        %v2126 = vld [vmem:[%s5 + $0x110] sm:$0xff]
        %v2127 = vld [vmem:[%s5 + $0x118] sm:$0xff]
        %v2128 = vld [vmem:[%s5 + $0x120] sm:$0xff]
        %v2129 = vld [vmem:[%s5 + $0x128] sm:$0xff]
        %v2130 = vld [vmem:[%s5 + $0x130] sm:$0xff]
        %v2131 = vld [vmem:[%s5 + $0x138] sm:$0xff]
        %v2132 = vld [vmem:[%s5 + $0x140] sm:$0xff]
        %v2133 = vld [vmem:[%s5 + $0x148] sm:$0xff]
        %v2134 = vld [vmem:[%s5 + $0x150] sm:$0xff]
        %v2135 = vld [vmem:[%s5 + $0x158] sm:$0xff]
        %v2136 = vld [vmem:[%s5 + $0x160] sm:$0xff]
        %v2137 = vld [vmem:[%s5 + $0x168] sm:$0xff]
        %v2138 = vld [vmem:[%s5 + $0x170] sm:$0xff]
        %v2139 = vld [vmem:[%s5 + $0x178] sm:$0xff]
        %v2188 = vunpack.c.l.b16 %v2092
        %v2189 = vunpack.c.h.b16 %v2092
        %v2190 = vunpack.c.l.b16 %v2093
        %v2191 = vunpack.c.h.b16 %v2093
        %v2192 = vunpack.c.l.b16 %v2094
        %v2193 = vunpack.c.h.b16 %v2094
        %v2194 = vunpack.c.l.b16 %v2095
        %v2195 = vunpack.c.h.b16 %v2095
        %v2196 = vunpack.c.l.b16 %v2096
        %v2197 = vunpack.c.h.b16 %v2096
        %v2198 = vunpack.c.l.b16 %v2097
        %v2199 = vunpack.c.h.b16 %v2097
        %v2200 = vunpack.c.l.b16 %v2098
        %v2201 = vunpack.c.h.b16 %v2098
        %v2202 = vunpack.c.l.b16 %v2099
        %v2203 = vunpack.c.h.b16 %v2099
        %v2204 = vunpack.c.l.b16 %v2100
        %v2205 = vunpack.c.h.b16 %v2100
        %v2206 = vunpack.c.l.b16 %v2101
        %v2207 = vunpack.c.h.b16 %v2101
        %v2208 = vunpack.c.l.b16 %v2102
        %v2209 = vunpack.c.h.b16 %v2102
        %v2210 = vunpack.c.l.b16 %v2103
        %v2211 = vunpack.c.h.b16 %v2103
        %v2212 = vunpack.c.l.b16 %v2104
        %v2213 = vunpack.c.h.b16 %v2104
        %v2214 = vunpack.c.l.b16 %v2105
        %v2215 = vunpack.c.h.b16 %v2105
        %v2216 = vunpack.c.l.b16 %v2106
        %v2217 = vunpack.c.h.b16 %v2106
        %v2218 = vunpack.c.l.b16 %v2107
        %v2219 = vunpack.c.h.b16 %v2107
        %v2220 = vunpack.c.l.b16 %v2108
        %v2221 = vunpack.c.h.b16 %v2108
        %v2222 = vunpack.c.l.b16 %v2109
        %v2223 = vunpack.c.h.b16 %v2109
        %v2224 = vunpack.c.l.b16 %v2110
        %v2225 = vunpack.c.h.b16 %v2110
        %v2226 = vunpack.c.l.b16 %v2111
        %v2227 = vunpack.c.h.b16 %v2111
        %v2228 = vunpack.c.l.b16 %v2112
        %v2229 = vunpack.c.h.b16 %v2112
        %v2230 = vunpack.c.l.b16 %v2113
        %v2231 = vunpack.c.h.b16 %v2113
        %v2232 = vunpack.c.l.b16 %v2114
        %v2233 = vunpack.c.h.b16 %v2114
        %v2234 = vunpack.c.l.b16 %v2115
        %v2235 = vunpack.c.h.b16 %v2115
        %v2236 = vunpack.c.l.b16 %v2116
        %v2237 = vunpack.c.h.b16 %v2116
        %v2238 = vunpack.c.l.b16 %v2117
        %v2239 = vunpack.c.h.b16 %v2117
        %v2240 = vunpack.c.l.b16 %v2118
        %v2241 = vunpack.c.h.b16 %v2118
        %v2242 = vunpack.c.l.b16 %v2119
        %v2243 = vunpack.c.h.b16 %v2119
        %v2244 = vunpack.c.l.b16 %v2120
        %v2245 = vunpack.c.h.b16 %v2120
        %v2246 = vunpack.c.l.b16 %v2121
        %v2247 = vunpack.c.h.b16 %v2121
        %v2248 = vunpack.c.l.b16 %v2122
        %v2249 = vunpack.c.h.b16 %v2122
        %v2250 = vunpack.c.l.b16 %v2123
        %v2251 = vunpack.c.h.b16 %v2123
        %v2252 = vunpack.c.l.b16 %v2124
        %v2253 = vunpack.c.h.b16 %v2124
        %v2254 = vunpack.c.l.b16 %v2125
        %v2255 = vunpack.c.h.b16 %v2125
        %v2256 = vunpack.c.l.b16 %v2126
        %v2257 = vunpack.c.h.b16 %v2126
        %v2258 = vunpack.c.l.b16 %v2127
        %v2259 = vunpack.c.h.b16 %v2127
        %v2260 = vunpack.c.l.b16 %v2128
        %v2261 = vunpack.c.h.b16 %v2128
        %v2262 = vunpack.c.l.b16 %v2129
        %v2263 = vunpack.c.h.b16 %v2129
        %v2264 = vunpack.c.l.b16 %v2130
        %v2265 = vunpack.c.h.b16 %v2130
        %v2266 = vunpack.c.l.b16 %v2131
        %v2267 = vunpack.c.h.b16 %v2131
        %v2268 = vunpack.c.l.b16 %v2132
        %v2269 = vunpack.c.h.b16 %v2132
        %v2270 = vunpack.c.l.b16 %v2133
        %v2271 = vunpack.c.h.b16 %v2133
        %v2272 = vunpack.c.l.b16 %v2134
        %v2273 = vunpack.c.h.b16 %v2134
        %v2274 = vunpack.c.l.b16 %v2135
        %v2275 = vunpack.c.h.b16 %v2135
        %v2276 = vunpack.c.l.b16 %v2136
        %v2277 = vunpack.c.h.b16 %v2136
        %v2278 = vunpack.c.l.b16 %v2137
        %v2279 = vunpack.c.h.b16 %v2137
        %v2280 = vunpack.c.l.b16 %v2138
        %v2281 = vunpack.c.h.b16 %v2138
        %v2282 = vunpack.c.l.b16 %v2139
        %v2283 = vunpack.c.h.b16 %v2139
        %v2284 = vpack.c.b16 %v2190, %v2188
        %v2285 = vpack.c.b16 %v2191, %v2189
        %v2286 = vpack.c.b16 %v2194, %v2192
        %v2287 = vpack.c.b16 %v2195, %v2193
        %v2288 = vpack.c.b16 %v2198, %v2196
        %v2289 = vpack.c.b16 %v2199, %v2197
        %v2290 = vpack.c.b16 %v2202, %v2200
        %v2291 = vpack.c.b16 %v2203, %v2201
        %v2292 = vpack.c.b16 %v2206, %v2204
        %v2293 = vpack.c.b16 %v2207, %v2205
        %v2294 = vpack.c.b16 %v2210, %v2208
        %v2295 = vpack.c.b16 %v2211, %v2209
        %v2296 = vpack.c.b16 %v2214, %v2212
        %v2297 = vpack.c.b16 %v2215, %v2213
        %v2298 = vpack.c.b16 %v2218, %v2216
        %v2299 = vpack.c.b16 %v2219, %v2217
        %v2300 = vpack.c.b16 %v2222, %v2220
        %v2301 = vpack.c.b16 %v2223, %v2221
        %v2302 = vpack.c.b16 %v2226, %v2224
        %v2303 = vpack.c.b16 %v2227, %v2225
        %v2304 = vpack.c.b16 %v2230, %v2228
        %v2305 = vpack.c.b16 %v2231, %v2229
        %v2306 = vpack.c.b16 %v2234, %v2232
        %v2307 = vpack.c.b16 %v2235, %v2233
        %v2308 = vpack.c.b16 %v2238, %v2236
        %v2309 = vpack.c.b16 %v2239, %v2237
        %v2310 = vpack.c.b16 %v2242, %v2240
        %v2311 = vpack.c.b16 %v2243, %v2241
        %v2312 = vpack.c.b16 %v2246, %v2244
        %v2313 = vpack.c.b16 %v2247, %v2245
        %v2314 = vpack.c.b16 %v2250, %v2248
        %v2315 = vpack.c.b16 %v2251, %v2249
        %v2316 = vpack.c.b16 %v2254, %v2252
        %v2317 = vpack.c.b16 %v2255, %v2253
        %v2318 = vpack.c.b16 %v2258, %v2256
        %v2319 = vpack.c.b16 %v2259, %v2257
        %v2320 = vpack.c.b16 %v2262, %v2260
        %v2321 = vpack.c.b16 %v2263, %v2261
        %v2322 = vpack.c.b16 %v2266, %v2264
        %v2323 = vpack.c.b16 %v2267, %v2265
        %v2324 = vpack.c.b16 %v2270, %v2268
        %v2325 = vpack.c.b16 %v2271, %v2269
        %v2326 = vpack.c.b16 %v2274, %v2272
        %v2327 = vpack.c.b16 %v2275, %v2273
        %v2328 = vpack.c.b16 %v2278, %v2276
        %v2329 = vpack.c.b16 %v2279, %v2277
        %v2330 = vpack.c.b16 %v2282, %v2280
        %v2331 = vpack.c.b16 %v2283, %v2281
        %2380 = vmatpush.bf16.msra.mxu0 %v2298
        %2381 = vmatpush.bf16.msra.mxu0 %v2296
        %2382 = vmatpush.bf16.msra.mxu0 %v2294
        %2383 = vmatpush.bf16.msra.mxu0 %v2292
        %2384 = vmatpush.bf16.msra.mxu0 %v2290
        %2385 = vmatpush.bf16.msra.mxu0 %v2288
        %2386 = vmatpush.bf16.msra.mxu0 %v2286
        %2387 = vmatpush.bf16.msra.mxu0 %v2284
        %2388 = vmatmul.bf16.gmra.mxu0 %v2062
        %v2389 = vpop.f32.mrf.mxu0
        %v2390 = vadd.f32 0.0, %v2389
        %v2391 = vpop.f32.mrf.mxu0
        %v2392 = vadd.f32 0.0, %v2391
        %2393 = vmatmul.bf16.gmra.mxu0 %v2063
        %v2394 = vpop.f32.mrf.mxu0
        %v2395 = vadd.f32 0.0, %v2394
        %v2396 = vpop.f32.mrf.mxu0
        %2397 = vdwg.mxu0
        %2398 = vmatpush.bf16.msra.mxu0 %v2314
        %2399 = vmatpush.bf16.msra.mxu0 %v2312
        %2400 = vmatpush.bf16.msra.mxu0 %v2310
        %2401 = vmatpush.bf16.msra.mxu0 %v2308
        %2402 = vmatpush.bf16.msra.mxu0 %v2306
        %2403 = vmatpush.bf16.msra.mxu0 %v2304
        %2404 = vmatpush.bf16.msra.mxu0 %v2302
        %2405 = vmatpush.bf16.msra.mxu0 %v2300
        %2406 = vmatmul.bf16.gmra.mxu0 %v1960
        %v2407 = vpop.f32.mrf.mxu0
        %v2408 = vadd.f32 %v2390, %v2407
        %v2409 = vpop.f32.mrf.mxu0
        %v2410 = vadd.f32 %v2392, %v2409
        %2411 = vmatmul.bf16.gmra.mxu0 %v1961
        %v2412 = vpop.f32.mrf.mxu0
        %v2413 = vadd.f32 %v2395, %v2412
        %v2414 = vpop.f32.mrf.mxu0
        %2415 = vdwg.mxu0
        %2416 = vmatpush.bf16.msra.mxu0 %v2330
        %2417 = vmatpush.bf16.msra.mxu0 %v2328
        %2418 = vmatpush.bf16.msra.mxu0 %v2326
        %2419 = vmatpush.bf16.msra.mxu0 %v2324
        %2420 = vmatpush.bf16.msra.mxu0 %v2322
        %2421 = vmatpush.bf16.msra.mxu0 %v2320
        %2422 = vmatpush.bf16.msra.mxu0 %v2318
        %2423 = vmatpush.bf16.msra.mxu0 %v2316
        %2424 = vmatmul.bf16.gmra.mxu0 %v2073
        %v2425 = vpop.f32.mrf.mxu0
        %v2426 = vadd.f32 %v2408, %v2425
        %v2427 = vpop.f32.mrf.mxu0
        %v2428 = vadd.f32 %v2410, %v2427
        %2429 = vmatmul.bf16.gmra.mxu0 %v2074
        %v2430 = vpop.f32.mrf.mxu0
        %v2431 = vadd.f32 %v2413, %v2430
        %v2432 = vpop.f32.mrf.mxu0
        %2433 = vdwg.mxu0
        %2434 = vmatpush.bf16.msra.mxu0 %v2299
        %2435 = vmatpush.bf16.msra.mxu0 %v2297
        %2436 = vmatpush.bf16.msra.mxu0 %v2295
        %2437 = vmatpush.bf16.msra.mxu0 %v2293
        %2438 = vmatpush.bf16.msra.mxu0 %v2291
        %2439 = vmatpush.bf16.msra.mxu0 %v2289
        %2440 = vmatpush.bf16.msra.mxu0 %v2287
        %2441 = vmatpush.bf16.msra.mxu0 %v2285
        %2442 = vmatmul.bf16.gmra.mxu0 %v2062
        %v2443 = vpop.f32.mrf.mxu0
        %v2444 = vadd.f32 0.0, %v2443
        %v2445 = vpop.f32.mrf.mxu0
        %v2446 = vadd.f32 0.0, %v2445
        %2447 = vmatmul.bf16.gmra.mxu0 %v2063
        %v2448 = vpop.f32.mrf.mxu0
        %v2449 = vadd.f32 0.0, %v2448
        %v2450 = vpop.f32.mrf.mxu0
        %2451 = vdwg.mxu0
        %2452 = vmatpush.bf16.msra.mxu0 %v2315
        %2453 = vmatpush.bf16.msra.mxu0 %v2313
        %2454 = vmatpush.bf16.msra.mxu0 %v2311
        %2455 = vmatpush.bf16.msra.mxu0 %v2309
        %2456 = vmatpush.bf16.msra.mxu0 %v2307
        %2457 = vmatpush.bf16.msra.mxu0 %v2305
        %2458 = vmatpush.bf16.msra.mxu0 %v2303
        %2459 = vmatpush.bf16.msra.mxu0 %v2301
        %2460 = vmatmul.bf16.gmra.mxu0 %v1960
        %v2461 = vpop.f32.mrf.mxu0
        %v2462 = vadd.f32 %v2444, %v2461
        %v2463 = vpop.f32.mrf.mxu0
        %v2464 = vadd.f32 %v2446, %v2463
        %2465 = vmatmul.bf16.gmra.mxu0 %v1961
        %v2466 = vpop.f32.mrf.mxu0
        %v2467 = vadd.f32 %v2449, %v2466
        %v2468 = vpop.f32.mrf.mxu0
        %2469 = vdwg.mxu0
        %2470 = vmatpush.bf16.msra.mxu0 %v2331
        %2471 = vmatpush.bf16.msra.mxu0 %v2329
        %2472 = vmatpush.bf16.msra.mxu0 %v2327
        %2473 = vmatpush.bf16.msra.mxu0 %v2325
        %2474 = vmatpush.bf16.msra.mxu0 %v2323
        %2475 = vmatpush.bf16.msra.mxu0 %v2321
        %2476 = vmatpush.bf16.msra.mxu0 %v2319
        %2477 = vmatpush.bf16.msra.mxu0 %v2317
        %2478 = vmatmul.bf16.gmra.mxu0 %v2073
        %v2479 = vpop.f32.mrf.mxu0
        %v2480 = vadd.f32 %v2462, %v2479
        %v2481 = vpop.f32.mrf.mxu0
        %v2482 = vadd.f32 %v2464, %v2481
        %2483 = vmatmul.bf16.gmra.mxu0 %v2074
        %v2484 = vpop.f32.mrf.mxu0
        %v2485 = vadd.f32 %v2467, %v2484
        %v2486 = vpop.f32.mrf.mxu0
        %2487 = vdwg.mxu0
        %v2488 = vld [vmem:[#allocation4] sm:$0xff]
        %v2489 = vld [vmem:[#allocation4 + $0x8] sm:$0xff]
        %v2490 = vld [vmem:[#allocation4 + $0x10] sm:$0xff]
        %v2491 = vld [vmem:[#allocation4 + $0x18] sm:$0xff]
        %v2492 = vld [vmem:[#allocation4 + $0x20] sm:$0xff]
        %v2493 = vld [vmem:[#allocation4 + $0x28] sm:$0xff]
        %v2494 = vld [vmem:[#allocation4 + $0x30] sm:$0xff]
        %v2495 = vld [vmem:[#allocation4 + $0x38] sm:$0xff]
        %v2496 = vld [vmem:[#allocation4 + $0x40] sm:$0xff]
        %v2497 = vld [vmem:[#allocation4 + $0x48] sm:$0xff]
        %v2498 = vld [vmem:[#allocation4 + $0x50] sm:$0xff]
        %v2499 = vld [vmem:[#allocation4 + $0x58] sm:$0xff]
        %v2500 = vld [vmem:[#allocation4 + $0x60] sm:$0xff]
        %v2501 = vld [vmem:[#allocation4 + $0x68] sm:$0xff]
        %v2502 = vld [vmem:[#allocation4 + $0x70] sm:$0xff]
        %v2503 = vld [vmem:[#allocation4 + $0x78] sm:$0xff]
        %v2504 = vld [vmem:[#allocation4 + $0x80] sm:$0xff]
        %v2505 = vld [vmem:[#allocation4 + $0x88] sm:$0xff]
        %v2506 = vld [vmem:[#allocation4 + $0x90] sm:$0xff]
        %v2507 = vld [vmem:[#allocation4 + $0x98] sm:$0xff]
        %v2508 = vld [vmem:[#allocation4 + $0xa0] sm:$0xff]
        %v2509 = vld [vmem:[#allocation4 + $0xa8] sm:$0xff]
        %v2510 = vld [vmem:[#allocation4 + $0xb0] sm:$0xff]
        %v2511 = vld [vmem:[#allocation4 + $0xb8] sm:$0xff]
        %v2512 = vld [vmem:[#allocation4 + $0xc0] sm:$0xff]
        %v2513 = vld [vmem:[#allocation4 + $0xc8] sm:$0xff]
        %v2514 = vld [vmem:[#allocation4 + $0xd0] sm:$0xff]
        %v2515 = vld [vmem:[#allocation4 + $0xd8] sm:$0xff]
        %v2516 = vld [vmem:[#allocation4 + $0xe0] sm:$0xff]
        %v2517 = vld [vmem:[#allocation4 + $0xe8] sm:$0xff]
        %v2518 = vld [vmem:[#allocation4 + $0xf0] sm:$0xff]
        %v2519 = vld [vmem:[#allocation4 + $0xf8] sm:$0xff]
        %v2520 = vld [vmem:[#allocation4 + $0x100] sm:$0xff]
        %v2521 = vld [vmem:[#allocation4 + $0x108] sm:$0xff]
        %v2522 = vld [vmem:[#allocation4 + $0x110] sm:$0xff]
        %v2523 = vld [vmem:[#allocation4 + $0x118] sm:$0xff]
        %v2524 = vld [vmem:[#allocation4 + $0x120] sm:$0xff]
        %v2525 = vld [vmem:[#allocation4 + $0x128] sm:$0xff]
        %v2526 = vld [vmem:[#allocation4 + $0x130] sm:$0xff]
        %v2527 = vld [vmem:[#allocation4 + $0x138] sm:$0xff]
        %v2528 = vld [vmem:[#allocation4 + $0x140] sm:$0xff]
        %v2529 = vld [vmem:[#allocation4 + $0x148] sm:$0xff]
        %v2530 = vld [vmem:[#allocation4 + $0x150] sm:$0xff]
        %v2531 = vld [vmem:[#allocation4 + $0x158] sm:$0xff]
        %v2532 = vld [vmem:[#allocation4 + $0x160] sm:$0xff]
        %v2533 = vld [vmem:[#allocation4 + $0x168] sm:$0xff]
        %v2534 = vld [vmem:[#allocation4 + $0x170] sm:$0xff]
        %v2535 = vld [vmem:[#allocation4 + $0x178] sm:$0xff]
        %v2584 = vunpack.c.l.b16 %v2488
        %v2585 = vunpack.c.h.b16 %v2488
        %v2586 = vunpack.c.l.b16 %v2489
        %v2587 = vunpack.c.h.b16 %v2489
        %v2588 = vunpack.c.l.b16 %v2490
        %v2589 = vunpack.c.h.b16 %v2490
        %v2590 = vunpack.c.l.b16 %v2491
        %v2591 = vunpack.c.h.b16 %v2491
        %v2592 = vunpack.c.l.b16 %v2492
        %v2593 = vunpack.c.h.b16 %v2492
        %v2594 = vunpack.c.l.b16 %v2493
        %v2595 = vunpack.c.h.b16 %v2493
        %v2596 = vunpack.c.l.b16 %v2494
        %v2597 = vunpack.c.h.b16 %v2494
        %v2598 = vunpack.c.l.b16 %v2495
        %v2599 = vunpack.c.h.b16 %v2495
        %v2600 = vunpack.c.l.b16 %v2496
        %v2601 = vunpack.c.h.b16 %v2496
        %v2602 = vunpack.c.l.b16 %v2497
        %v2603 = vunpack.c.h.b16 %v2497
        %v2604 = vunpack.c.l.b16 %v2498
        %v2605 = vunpack.c.h.b16 %v2498
        %v2606 = vunpack.c.l.b16 %v2499
        %v2607 = vunpack.c.h.b16 %v2499
        %v2608 = vunpack.c.l.b16 %v2500
        %v2609 = vunpack.c.h.b16 %v2500
        %v2610 = vunpack.c.l.b16 %v2501
        %v2611 = vunpack.c.h.b16 %v2501
        %v2612 = vunpack.c.l.b16 %v2502
        %v2613 = vunpack.c.h.b16 %v2502
        %v2614 = vunpack.c.l.b16 %v2503
        %v2615 = vunpack.c.h.b16 %v2503
        %v2616 = vunpack.c.l.b16 %v2504
        %v2617 = vunpack.c.h.b16 %v2504
        %v2618 = vunpack.c.l.b16 %v2505
        %v2619 = vunpack.c.h.b16 %v2505
        %v2620 = vunpack.c.l.b16 %v2506
        %v2621 = vunpack.c.h.b16 %v2506
        %v2622 = vunpack.c.l.b16 %v2507
        %v2623 = vunpack.c.h.b16 %v2507
        %v2624 = vunpack.c.l.b16 %v2508
        %v2625 = vunpack.c.h.b16 %v2508
        %v2626 = vunpack.c.l.b16 %v2509
        %v2627 = vunpack.c.h.b16 %v2509
        %v2628 = vunpack.c.l.b16 %v2510
        %v2629 = vunpack.c.h.b16 %v2510
        %v2630 = vunpack.c.l.b16 %v2511
        %v2631 = vunpack.c.h.b16 %v2511
        %v2632 = vunpack.c.l.b16 %v2512
        %v2633 = vunpack.c.h.b16 %v2512
        %v2634 = vunpack.c.l.b16 %v2513
        %v2635 = vunpack.c.h.b16 %v2513
        %v2636 = vunpack.c.l.b16 %v2514
        %v2637 = vunpack.c.h.b16 %v2514
        %v2638 = vunpack.c.l.b16 %v2515
        %v2639 = vunpack.c.h.b16 %v2515
        %v2640 = vunpack.c.l.b16 %v2516
        %v2641 = vunpack.c.h.b16 %v2516
        %v2642 = vunpack.c.l.b16 %v2517
        %v2643 = vunpack.c.h.b16 %v2517
        %v2644 = vunpack.c.l.b16 %v2518
        %v2645 = vunpack.c.h.b16 %v2518
        %v2646 = vunpack.c.l.b16 %v2519
        %v2647 = vunpack.c.h.b16 %v2519
        %v2648 = vunpack.c.l.b16 %v2520
        %v2649 = vunpack.c.h.b16 %v2520
        %v2650 = vunpack.c.l.b16 %v2521
        %v2651 = vunpack.c.h.b16 %v2521
        %v2652 = vunpack.c.l.b16 %v2522
        %v2653 = vunpack.c.h.b16 %v2522
        %v2654 = vunpack.c.l.b16 %v2523
        %v2655 = vunpack.c.h.b16 %v2523
        %v2656 = vunpack.c.l.b16 %v2524
        %v2657 = vunpack.c.h.b16 %v2524
        %v2658 = vunpack.c.l.b16 %v2525
        %v2659 = vunpack.c.h.b16 %v2525
        %v2660 = vunpack.c.l.b16 %v2526
        %v2661 = vunpack.c.h.b16 %v2526
        %v2662 = vunpack.c.l.b16 %v2527
        %v2663 = vunpack.c.h.b16 %v2527
        %v2664 = vunpack.c.l.b16 %v2528
        %v2665 = vunpack.c.h.b16 %v2528
        %v2666 = vunpack.c.l.b16 %v2529
        %v2667 = vunpack.c.h.b16 %v2529
        %v2668 = vunpack.c.l.b16 %v2530
        %v2669 = vunpack.c.h.b16 %v2530
        %v2670 = vunpack.c.l.b16 %v2531
        %v2671 = vunpack.c.h.b16 %v2531
        %v2672 = vunpack.c.l.b16 %v2532
        %v2673 = vunpack.c.h.b16 %v2532
        %v2674 = vunpack.c.l.b16 %v2533
        %v2675 = vunpack.c.h.b16 %v2533
        %v2676 = vunpack.c.l.b16 %v2534
        %v2677 = vunpack.c.h.b16 %v2534
        %v2678 = vunpack.c.l.b16 %v2535
        %v2679 = vunpack.c.h.b16 %v2535
        %v2680 = vpack.c.b16 %v2586, %v2584
        %v2681 = vpack.c.b16 %v2587, %v2585
        %v2682 = vpack.c.b16 %v2590, %v2588
        %v2683 = vpack.c.b16 %v2591, %v2589
        %v2684 = vpack.c.b16 %v2594, %v2592
        %v2685 = vpack.c.b16 %v2595, %v2593
        %v2686 = vpack.c.b16 %v2598, %v2596
        %v2687 = vpack.c.b16 %v2599, %v2597
        %v2688 = vpack.c.b16 %v2602, %v2600
        %v2689 = vpack.c.b16 %v2603, %v2601
        %v2690 = vpack.c.b16 %v2606, %v2604
        %v2691 = vpack.c.b16 %v2607, %v2605
        %v2692 = vpack.c.b16 %v2610, %v2608
        %v2693 = vpack.c.b16 %v2611, %v2609
        %v2694 = vpack.c.b16 %v2614, %v2612
        %v2695 = vpack.c.b16 %v2615, %v2613
        %v2696 = vpack.c.b16 %v2618, %v2616
        %v2697 = vpack.c.b16 %v2619, %v2617
        %v2698 = vpack.c.b16 %v2622, %v2620
        %v2699 = vpack.c.b16 %v2623, %v2621
        %v2700 = vpack.c.b16 %v2626, %v2624
        %v2701 = vpack.c.b16 %v2627, %v2625
        %v2702 = vpack.c.b16 %v2630, %v2628
        %v2703 = vpack.c.b16 %v2631, %v2629
        %v2704 = vpack.c.b16 %v2634, %v2632
        %v2705 = vpack.c.b16 %v2635, %v2633
        %v2706 = vpack.c.b16 %v2638, %v2636
        %v2707 = vpack.c.b16 %v2639, %v2637
        %v2708 = vpack.c.b16 %v2642, %v2640
        %v2709 = vpack.c.b16 %v2643, %v2641
        %v2710 = vpack.c.b16 %v2646, %v2644
        %v2711 = vpack.c.b16 %v2647, %v2645
        %v2712 = vpack.c.b16 %v2650, %v2648
        %v2713 = vpack.c.b16 %v2651, %v2649
        %v2714 = vpack.c.b16 %v2654, %v2652
        %v2715 = vpack.c.b16 %v2655, %v2653
        %v2716 = vpack.c.b16 %v2658, %v2656
        %v2717 = vpack.c.b16 %v2659, %v2657
        %v2718 = vpack.c.b16 %v2662, %v2660
        %v2719 = vpack.c.b16 %v2663, %v2661
        %v2720 = vpack.c.b16 %v2666, %v2664
        %v2721 = vpack.c.b16 %v2667, %v2665
        %v2722 = vpack.c.b16 %v2670, %v2668
        %v2723 = vpack.c.b16 %v2671, %v2669
        %v2724 = vpack.c.b16 %v2674, %v2672
        %v2725 = vpack.c.b16 %v2675, %v2673
        %v2726 = vpack.c.b16 %v2678, %v2676
        %v2727 = vpack.c.b16 %v2679, %v2677
        %2776 = vmatpush.bf16.msra.mxu0 %v2694
        %2777 = vmatpush.bf16.msra.mxu0 %v2692
        %2778 = vmatpush.bf16.msra.mxu0 %v2690
        %2779 = vmatpush.bf16.msra.mxu0 %v2688
        %2780 = vmatpush.bf16.msra.mxu0 %v2686
        %2781 = vmatpush.bf16.msra.mxu0 %v2684
        %2782 = vmatpush.bf16.msra.mxu0 %v2682
        %2783 = vmatpush.bf16.msra.mxu0 %v2680
        %2784 = vmatmul.bf16.gmra.mxu0 %v2080
        %v2785 = vpop.f32.mrf.mxu0
        %v2786 = vadd.f32 0.0, %v2785
        %v2787 = vpop.f32.mrf.mxu0
        %v2788 = vadd.f32 0.0, %v2787
        %2789 = vmatmul.bf16.gmra.mxu0 %v2081
        %v2790 = vpop.f32.mrf.mxu0
        %v2791 = vadd.f32 0.0, %v2790
        %v2792 = vpop.f32.mrf.mxu0
        %2793 = vdwg.mxu0
        %2794 = vmatpush.bf16.msra.mxu0 %v2710
        %2795 = vmatpush.bf16.msra.mxu0 %v2708
        %2796 = vmatpush.bf16.msra.mxu0 %v2706
        %2797 = vmatpush.bf16.msra.mxu0 %v2704
        %2798 = vmatpush.bf16.msra.mxu0 %v2702
        %2799 = vmatpush.bf16.msra.mxu0 %v2700
        %2800 = vmatpush.bf16.msra.mxu0 %v2698
        %2801 = vmatpush.bf16.msra.mxu0 %v2696
        %2802 = vmatmul.bf16.gmra.mxu0 %v1969
        %v2803 = vpop.f32.mrf.mxu0
        %v2804 = vadd.f32 %v2786, %v2803
        %v2805 = vpop.f32.mrf.mxu0
        %v2806 = vadd.f32 %v2788, %v2805
        %2807 = vmatmul.bf16.gmra.mxu0 %v1970
        %v2808 = vpop.f32.mrf.mxu0
        %v2809 = vadd.f32 %v2791, %v2808
        %v2810 = vpop.f32.mrf.mxu0
        %2811 = vdwg.mxu0
        %2812 = vmatpush.bf16.msra.mxu0 %v2726
        %2813 = vmatpush.bf16.msra.mxu0 %v2724
        %2814 = vmatpush.bf16.msra.mxu0 %v2722
        %2815 = vmatpush.bf16.msra.mxu0 %v2720
        %2816 = vmatpush.bf16.msra.mxu0 %v2718
        %2817 = vmatpush.bf16.msra.mxu0 %v2716
        %2818 = vmatpush.bf16.msra.mxu0 %v2714
        %2819 = vmatpush.bf16.msra.mxu0 %v2712
        %2820 = vmatmul.bf16.gmra.mxu0 %v2088
        %v2821 = vpop.f32.mrf.mxu0
        %v2822 = vadd.f32 %v2804, %v2821
        %v2823 = vpop.f32.mrf.mxu0
        %v2824 = vadd.f32 %v2806, %v2823
        %2825 = vmatmul.bf16.gmra.mxu0 %v2089
        %v2826 = vpop.f32.mrf.mxu0
        %v2827 = vadd.f32 %v2809, %v2826
        %v2828 = vpop.f32.mrf.mxu0
        %2829 = vdwg.mxu0
        %2830 = vmatpush.bf16.msra.mxu0 %v2695
        %2831 = vmatpush.bf16.msra.mxu0 %v2693
        %2832 = vmatpush.bf16.msra.mxu0 %v2691
        %2833 = vmatpush.bf16.msra.mxu0 %v2689
        %2834 = vmatpush.bf16.msra.mxu0 %v2687
        %2835 = vmatpush.bf16.msra.mxu0 %v2685
        %2836 = vmatpush.bf16.msra.mxu0 %v2683
        %2837 = vmatpush.bf16.msra.mxu0 %v2681
        %2838 = vmatmul.bf16.gmra.mxu0 %v2080
        %v2839 = vpop.f32.mrf.mxu0
        %v2840 = vadd.f32 0.0, %v2839
        %v2841 = vpop.f32.mrf.mxu0
        %v2842 = vadd.f32 0.0, %v2841
        %2843 = vmatmul.bf16.gmra.mxu0 %v2081
        %v2844 = vpop.f32.mrf.mxu0
        %v2845 = vadd.f32 0.0, %v2844
        %v2846 = vpop.f32.mrf.mxu0
        %2847 = vdwg.mxu0
        %2848 = vmatpush.bf16.msra.mxu0 %v2711
        %2849 = vmatpush.bf16.msra.mxu0 %v2709
        %2850 = vmatpush.bf16.msra.mxu0 %v2707
        %2851 = vmatpush.bf16.msra.mxu0 %v2705
        %2852 = vmatpush.bf16.msra.mxu0 %v2703
        %2853 = vmatpush.bf16.msra.mxu0 %v2701
        %2854 = vmatpush.bf16.msra.mxu0 %v2699
        %2855 = vmatpush.bf16.msra.mxu0 %v2697
        %2856 = vmatmul.bf16.gmra.mxu0 %v1969
        %v2857 = vpop.f32.mrf.mxu0
        %v2858 = vadd.f32 %v2840, %v2857
        %v2859 = vpop.f32.mrf.mxu0
        %v2860 = vadd.f32 %v2842, %v2859
        %2861 = vmatmul.bf16.gmra.mxu0 %v1970
        %v2862 = vpop.f32.mrf.mxu0
        %v2863 = vadd.f32 %v2845, %v2862
        %v2864 = vpop.f32.mrf.mxu0
        %2865 = vdwg.mxu0
        %2866 = vmatpush.bf16.msra.mxu0 %v2727
        %2867 = vmatpush.bf16.msra.mxu0 %v2725
        %2868 = vmatpush.bf16.msra.mxu0 %v2723
        %2869 = vmatpush.bf16.msra.mxu0 %v2721
        %2870 = vmatpush.bf16.msra.mxu0 %v2719
        %2871 = vmatpush.bf16.msra.mxu0 %v2717
        %2872 = vmatpush.bf16.msra.mxu0 %v2715
        %2873 = vmatpush.bf16.msra.mxu0 %v2713
        %2874 = vmatmul.bf16.gmra.mxu0 %v2088
        %v2875 = vpop.f32.mrf.mxu0
        %v2876 = vadd.f32 %v2858, %v2875
        %v2877 = vpop.f32.mrf.mxu0
        %v2878 = vadd.f32 %v2860, %v2877
        %2879 = vmatmul.bf16.gmra.mxu0 %v2089
        %v2880 = vpop.f32.mrf.mxu0
        %v2881 = vadd.f32 %v2863, %v2880
        %v2882 = vpop.f32.mrf.mxu0
        %2883 = vdwg.mxu0
        %v2884 = vadd.f32 %v1162, %v2426
        %v2885 = vadd.f32 %v1164, %v2428
        %v2886 = vadd.f32 %v1167, %v2431
        %v2887 = vld [vmem:[%s7 + $0x2] sm:$0x1]
        %v2888 = vperm.slane %v2887, 0
        %v2889 = vadd.f32 %v2884, %v2888
        %v2890 = vadd.f32 %v2885, %v2888
        %v2891 = vadd.f32 %v2886, %v2888
        %v2892 = vadd.f32 %v1216, %v2480
        %v2893 = vadd.f32 %v1218, %v2482
        %v2894 = vadd.f32 %v1221, %v2485
        %v2895 = vld [vmem:[%s7 + $0x3] sm:$0x1]
        %v2896 = vperm.slane %v2895, 0
        %v2897 = vadd.f32 %v2892, %v2896
        %v2898 = vadd.f32 %v2893, %v2896
        %v2899 = vadd.f32 %v2894, %v2896
        %v2900 = vadd.f32 %v1804, %v2822
        %v2901 = vadd.f32 %v1806, %v2824
        %v2902 = vadd.f32 %v1809, %v2827
        %v2903 = vld [vmem:[%s7 + $0x4] sm:$0x1]
        %v2904 = vperm.slane %v2903, 0
        %v2905 = vadd.f32 %v2900, %v2904
        %v2906 = vadd.f32 %v2901, %v2904
        %v2907 = vadd.f32 %v2902, %v2904
        %v2908 = vadd.f32 %v1858, %v2876
        %v2909 = vadd.f32 %v1860, %v2878
        %v2910 = vadd.f32 %v1863, %v2881
        %v2911 = vld [vmem:[%s7 + $0x5] sm:$0x1]
        %v2912 = vperm.slane %v2911, 0
        %v2913 = vadd.f32 %v2908, %v2912
        %v2914 = vadd.f32 %v2909, %v2912
        %v2915 = vadd.f32 %v2910, %v2912
        %v2916 = vmul.f32 %v1936, %v2889
        %v2917 = vmul.f32 %v1937, %v2890
        %v2918 = vmul.f32 %v1938, %v2891
        %v2919 = vmul.f32 %v1942, %v2897
        %v2920 = vmul.f32 %v1943, %v2898
        %v2921 = vmul.f32 %v1944, %v2899
        %v2922 = vadd.f32 %v2916, %v2919
        %v2923 = vadd.f32 %v2917, %v2920
        %v2924 = vadd.f32 %v2918, %v2921
        %v2925 = vpack.c.bf16 %v2922, %v2922
        %v2926 = vpack.c.bf16 %v2923, %v2923
        %v2927 = vpack.c.bf16 %v2924, %v2924
        %2928 = vst [vmem:[%s394] sm:$0xf] %v2925
        %2929 = vst [vmem:[%s394 + $0x4] sm:$0xf] %v2926
        %2930 = vst [vmem:[%s394 + $0x8] sm:$0x1] %v2927
        %v2931 = vmul.f32 %v1939, %v2905
        %v2932 = vmul.f32 %v1940, %v2906
        %v2933 = vmul.f32 %v1941, %v2907
        %v2934 = vmul.f32 %v1945, %v2913
        %v2935 = vmul.f32 %v1946, %v2914
        %v2936 = vmul.f32 %v1947, %v2915
        %v2937 = vadd.f32 %v2931, %v2934
        %v2938 = vadd.f32 %v2932, %v2935
        %v2939 = vadd.f32 %v2933, %v2936
        %v2940 = vpack.c.bf16 %v2937, %v2937
        %v2941 = vpack.c.bf16 %v2938, %v2938
        %v2942 = vpack.c.bf16 %v2939, %v2939
        %2943 = vst [vmem:[%s399] sm:$0xf] %v2940
        %2944 = vst [vmem:[%s399 + $0x4] sm:$0xf] %v2941
        %2945 = vst [vmem:[%s399 + $0x8] sm:$0x1] %v2942
        %p2946 = scmp.lt.s32.totalorder %s23, 1
        %s2947 = scalar_select %p2946, %s23, 1
        %s2948 = smul.addr %s2947, 3
        %s2949 = smul.addr %s2948, 4
        %s2950 = scalar_lea.vmem %s8, %s2949
        %p2951 = scmp.lt.s32.totalorder %s23, 1
        %s2952 = scalar_select %p2951, %s23, 1
        %s2953 = smul.addr %s2952, 3
        %s2954 = smul.addr %s2953, 4
        %s2955 = scalar_lea.vmem %s9, %s2954
        // Predicated region
        $region61: #{ifm_forward.1} parent=51 // pred_check
          %p2956 = pneg %p219
        $region62: #{ifm_forward.1} parent=51 // pred_check_branch
          %2958 = sbr.rel (%p2956) target = $region64
        $region63: #{ifm_forward.1} parent=51 // pred_region
          _
        $region64: #{ifm_forward.1} parent=51 // pred_fallthru
          _
        // Predicated region
        $region65: #{ifm_forward.1} parent=51 // pred_check
          %p2959 = pneg %p245
        $region66: #{ifm_forward.1} parent=51 // pred_check_branch
          %2961 = sbr.rel (%p2959) target = $region68
        $region67: #{ifm_forward.1} parent=51 // pred_region
          _
        $region68: #{ifm_forward.1} parent=51 // pred_fallthru
          _
      $region52: #{ifm_forward.1} parent=5 // pred_fallthru
        _
      %p2962 = scmp.le.s32.totalorder 2, %s18
      // Predicated region
      $region69: #{ifm_forward.1} parent=5 // pred_check
        %p2963 = pneg %p2962
      $region70: #{ifm_forward.1} parent=5 // pred_check_branch
        %2965 = sbr.rel (%p2963) target = $region72
      $region71: #{ifm_forward.1} parent=5 // pred_region
        %s2966 = ssub.s32 %s18, 2
        // Predicated region
        $region73: #{ifm_forward.1} parent=71 // pred_check
          %p2967 = pneg %p225
        $region74: #{ifm_forward.1} parent=71 // pred_check_branch
          %2969 = sbr.rel (%p2967) target = $region76
        $region75: #{ifm_forward.1} parent=71 // pred_region
          %p2970 = scmp.lt.s32.totalorder %s24, 1
          %s2971 = scalar_select %p2970, %s24, 1
          %s2972 = smul.addr %s2971, 3
          %s2973 = smul.addr %s2972, 4
          %s2974 = scalar_lea.vmem %s8, %s2973
        $region76: #{ifm_forward.1} parent=71 // pred_fallthru
          _
        // Predicated region
        $region77: #{ifm_forward.1} parent=71 // pred_check
          %p2975 = pneg %p251
        $region78: #{ifm_forward.1} parent=71 // pred_check_branch
          %2977 = sbr.rel (%p2975) target = $region80
        $region79: #{ifm_forward.1} parent=71 // pred_region
          %p2978 = scmp.lt.s32.totalorder %s24, 1
          %s2979 = scalar_select %p2978, %s24, 1
          %s2980 = smul.addr %s2979, 3
          %s2981 = smul.addr %s2980, 4
          %s2982 = scalar_lea.vmem %s9, %s2981
        $region80: #{ifm_forward.1} parent=71 // pred_fallthru
          _
      $region72: #{ifm_forward.1} parent=5 // pred_fallthru
        _
    $region6: #{ifm_forward.1} parent=1 // loop_footer
      %s22 = sadd.s32 1, %s18
    $region7: #{ifm_forward.1} parent=1 // loop_footer_branch
      %17 = sbr.rel target = $region3
    $region8: #{ifm_forward.1} parent=1 // loop_exit
      _
    %2983 = vsyncpa [#allocation3], 1
    %s2984 = scalar_lea.sflag [#allocation3], 1
    %2985 = vsyncpa %s2984, 1
    %2986 = vsyncpa [#allocation5], 1

</llo_original>
